<compile_context>
chip_gen: v5e
topology: v5e:2x2
jax: 0.10.0
libtpu: 0.0.40
codegen_flags: <defaults>
</compile_context>

<pallas_src>
import functools

import jax
import jax.numpy as jnp
from jax.experimental import pallas as pl
from jax.experimental.pallas import tpu as pltpu


def _cdiv(a: int, b: int) -> int:
    return (a + b - 1) // b


def _round_up(x: int, m: int) -> int:
    return _cdiv(x, m) * m


def _pad2d(a: jax.Array, rows: int, cols: int) -> jax.Array:
    r, c = a.shape
    if r == rows and c == cols:
        return a
    return jnp.pad(a, ((0, rows - r), (0, cols - c)))


def _vmem_capacity_bytes() -> int:
    """Per-TensorCore VMEM capacity; conservative (v7x) fallback if unknown."""
    try:
        return int(pltpu.get_tpu_info().vmem_capacity_bytes)
    except Exception:
        return 64 << 20


def _lane_pad(d: int, compute_dtype) -> int:
    """Pad a K/N dim to 128 lanes; prefer 256 for bf16 when padding is cheap
    (fills the 256-wide MXU on v6e/v7x)."""
    p128 = _round_up(d, 128)
    if jnp.dtype(compute_dtype) == jnp.dtype(jnp.bfloat16):
        p256 = _round_up(d, 256)
        if p256 * 4 <= p128 * 5:  # <=25% extra padding over 128-alignment
            return p256
    return p128


def _pick_tile(dim: int, cap: int) -> int:
    """Largest multiple of 128 <= cap that divides `dim` (dim is a multiple of 128)."""
    t = min(dim, cap)
    t -= t % 128
    t = max(t, 128)
    while dim % t != 0:
        t -= 128
    return t


# ----------------------------------------------------------------------------
# Kernels
# ----------------------------------------------------------------------------
def _ffn_fused_kernel(x_ref, *refs, num_layers: int, compute_dtype):
    """refs = (w0, b0, w1, b1, ..., out). One (TM, K) row tile per grid step;
    the whole layer stack runs on that tile with intermediates kept on-chip."""
    o_ref = refs[-1]
    wb = refs[:-1]

    h = x_ref[...]
    for l in range(num_layers):
        w = wb[2 * l][...]                         # (Kp, Np), compute_dtype
        b = wb[2 * l + 1][...]                     # (1, Np), f32
        y = jnp.dot(h.astype(compute_dtype), w,
                    preferred_element_type=jnp.float32)     # MXU, f32 acc
        y = y + b.astype(jnp.float32)
        if l < num_layers - 1:
            y = jnp.maximum(y, 0.0)                # ReLU between layers only
        h = y
    o_ref[...] = h.astype(o_ref.dtype)


def _linear_kernel(x_ref, w_ref, b_ref, o_ref, acc_ref, *, apply_relu: bool):
    """Weight-streaming path: (M, N, K)-tiled matmul with f32 accumulator and
    fused bias (+ ReLU) epilogue on the last K step."""
    @pl.when(pl.program_id(2) == 0)
    def _init():
        acc_ref[...] = jnp.zeros_like(acc_ref)

    acc_ref[...] += jnp.dot(x_ref[...], w_ref[...],
                            preferred_element_type=jnp.float32)

    @pl.when(pl.program_id(2) == pl.num_programs(2) - 1)
    def _finalize():
        y = acc_ref[...] + b_ref[...].astype(jnp.float32)
        if apply_relu:
            y = jnp.maximum(y, 0.0)
        o_ref[...] = y.astype(o_ref.dtype)


# ----------------------------------------------------------------------------
# Wrapper
# ----------------------------------------------------------------------------
def ffn_forward(x: jax.Array, params, *, compute_dtype=jnp.bfloat16,
                out_dtype=None, tm: int = 512, mode: str = "auto") -> jax.Array:
    """x: (..., input_dim) -> (..., output_dim).
    params: list of (W (in,out), b (1,out)).
    mode: "auto" (pick fused vs streaming from VMEM budget), "fused", "stream".
    """
    lead = x.shape[:-1]
    in_dim = x.shape[-1]
    out_dim = params[-1][0].shape[1]
    num_layers = len(params)
    out_dtype = x.dtype if out_dtype is None else jnp.dtype(out_dtype)

    x2d = x.reshape(-1, in_dim)
    M = x2d.shape[0]

    dims = [in_dim] + [w.shape[1] for (w, _) in params]
    dims_pad = [_lane_pad(d, compute_dtype) for d in dims]
    max_dim = max(dims_pad)

    c_item = jnp.dtype(compute_dtype).itemsize
    o_item = jnp.dtype(out_dtype).itemsize

    # Single-buffered resident weights + f32 biases (padded sizes).
    w_bytes = sum(dims_pad[l] * dims_pad[l + 1] * c_item + dims_pad[l + 1] * 4
                  for l in range(num_layers))

    # Per-chip VMEM budget (v5e/v6e: 128 MiB, v7x: 64 MiB per TensorCore).
    capacity = _vmem_capacity_bytes()
    budget = int(capacity * 0.80)       # planning budget
    limit_cap = int(capacity * 0.85)    # hard cap handed to the compiler

    # Balanced row tiles; guarantee >=2 tiles (both v7x TCs fed) unless M tiny.
    min_tiles = 2 if M >= 16 else 1
    n_tiles = max(_cdiv(M, tm), min_tiles)
    TM = _round_up(_cdiv(M, n_tiles), 8)

    def fused_need(tm_rows: int) -> int:
        io = 2 * tm_rows * dims_pad[0] * c_item + 2 * tm_rows * dims_pad[-1] * o_item
        act = 2 * tm_rows * max_dim * 4          # f32 intermediates (h, y)
        return w_bytes + io + act                # weights counted once

    if mode == "fused":
        use_fused = True
    elif mode == "stream":
        use_fused = False
    else:
        use_fused = True
        while fused_need(TM) > budget and TM > 8:
            TM = max(8, _round_up(TM // 2, 8))
        if fused_need(TM) > budget:
            use_fused = False                    # weights don't fit resident

    n_tiles = max(_cdiv(M, TM), min_tiles)
    M_pad = n_tiles * TM

    # Pad + cast operands (zero padding is numerically exact here).
    x_p = _pad2d(x2d, M_pad, dims_pad[0]).astype(compute_dtype)
    wbs = []
    for l, (w, b) in enumerate(params):
        kp, np_ = dims_pad[l], dims_pad[l + 1]
        wbs.append(_pad2d(w, kp, np_).astype(compute_dtype))
        wbs.append(_pad2d(b.reshape(1, -1).astype(jnp.float32), 1, np_))

    if use_fused:
        need = fused_need(TM)
        vmem_limit = int(min(limit_cap, max(need + (8 << 20), 32 << 20)))

        flops = sum(2 * M_pad * dims_pad[l] * dims_pad[l + 1]
                    for l in range(num_layers))
        bytes_accessed = int(M_pad * dims_pad[0] * c_item + w_bytes
                             + M_pad * dims_pad[-1] * o_item)
        cost = pl.CostEstimate(flops=int(flops), transcendentals=0,
                               bytes_accessed=bytes_accessed)

        kernel = functools.partial(_ffn_fused_kernel, num_layers=num_layers,
                                   compute_dtype=compute_dtype)

        def call_fused(single_buffer_weights: bool):
            in_specs = [pl.BlockSpec((TM, dims_pad[0]), lambda i: (i, 0))]
            for l in range(num_layers):
                kp, np_ = dims_pad[l], dims_pad[l + 1]
                if single_buffer_weights:
                    # Loop-invariant operands: one VMEM buffer, not two.
                    in_specs.append(pl.BlockSpec((kp, np_), lambda i: (0, 0),
                                                 pipeline_mode=pl.Buffered(1)))
                    in_specs.append(pl.BlockSpec((1, np_), lambda i: (0, 0),
                                                 pipeline_mode=pl.Buffered(1)))
                else:
                    in_specs.append(pl.BlockSpec((kp, np_), lambda i: (0, 0)))
                    in_specs.append(pl.BlockSpec((1, np_), lambda i: (0, 0)))
            out_specs = pl.BlockSpec((TM, dims_pad[-1]), lambda i: (i, 0))
            return pl.pallas_call(
                kernel,
                out_shape=jax.ShapeDtypeStruct((M_pad, dims_pad[-1]), out_dtype),
                grid_spec=pltpu.PrefetchScalarGridSpec(
                    num_scalar_prefetch=0,
                    grid=(M_pad // TM,),
                    in_specs=in_specs,
                    out_specs=out_specs,
                ),
                compiler_params=pltpu.CompilerParams(
                    dimension_semantics=("parallel",),
                    vmem_limit_bytes=vmem_limit,
                ),
                cost_estimate=cost,
            )(x_p, *wbs)

        try:
            out_p = call_fused(True)
        except Exception:
            # Fallback if this jax build rejects pipeline_mode / Buffered(1).
            out_p = call_fused(False)
    else:
        # Weight-streaming fallback: per-layer (M, N, K)-tiled matmuls.
        h = x_p
        for l in range(num_layers):
            kp, np_ = dims_pad[l], dims_pad[l + 1]
            w_p, b_p = wbs[2 * l], wbs[2 * l + 1]
            last = (l == num_layers - 1)
            layer_out_dtype = out_dtype if last else jnp.dtype(compute_dtype)
            tk = _pick_tile(kp, 512)
            tn = _pick_tile(np_, 512)
            need = (2 * (TM * tk * c_item + tk * tn * c_item + tn * 4
                         + TM * tn * layer_out_dtype.itemsize)
                    + TM * tn * 4)
            vmem_limit = int(min(limit_cap, max(need + (8 << 20), 32 << 20)))
            kern = functools.partial(_linear_kernel, apply_relu=not last)
            h = pl.pallas_call(
                kern,
                out_shape=jax.ShapeDtypeStruct((M_pad, np_), layer_out_dtype),
                grid_spec=pltpu.PrefetchScalarGridSpec(
                    num_scalar_prefetch=0,
                    grid=(M_pad // TM, np_ // tn, kp // tk),
                    in_specs=[
                        pl.BlockSpec((TM, tk), lambda i, j, k: (i, k)),
                        pl.BlockSpec((tk, tn), lambda i, j, k: (k, j)),
                        pl.BlockSpec((1, tn), lambda i, j, k: (0, j)),
                    ],
                    out_specs=pl.BlockSpec((TM, tn), lambda i, j, k: (i, j)),
                    scratch_shapes=[pltpu.VMEM((TM, tn), jnp.float32)],
                ),
                compiler_params=pltpu.CompilerParams(
                    dimension_semantics=("parallel", "parallel", "arbitrary"),
                    vmem_limit_bytes=vmem_limit,
                ),
            )(h, w_p, b_p)
        out_p = h

    return out_p[:M, :out_dim].reshape(*lead, out_dim)


# ----------------------------------------------------------------------------
# Params / reference
# ----------------------------------------------------------------------------
def init_ffn_params(key, input_dim, hidden_dim, output_dim, num_layers):
    """nn.Linear default init U(-1/sqrt(fan_in), 1/sqrt(fan_in));
    weights stored as (in_features, out_features)."""
    h = [hidden_dim] * (num_layers - 1)
    dims_in = [input_dim] + h
    dims_out = h + [output_dim]
    params = []
    for n_in, n_out in zip(dims_in, dims_out):
        key, kw, kb = jax.random.split(key, 3)
        bound = 1.0 / (n_in ** 0.5)
        w = jax.random.uniform(kw, (n_in, n_out), jnp.float32, -bound, bound)
        b = jax.random.uniform(kb, (1, n_out), jnp.float32, -bound, bound)
        params.append((w, b))
    return params


def ffn_reference(x, params):
    x2d = x.reshape(-1, x.shape[-1]).astype(jnp.float32)
    n = len(params)
    for i, (w, b) in enumerate(params):
        x2d = x2d @ w + b
        if i < n - 1:
            x2d = jnp.maximum(x2d, 0.0)
    return x2d.reshape(*x.shape[:-1], params[-1][0].shape[1])


if __name__ == "__main__":
    key = jax.random.PRNGKey(0)
    k_x, k_p = jax.random.split(key)

    batch, seq = 2, 8
    input_dim, hidden_dim, output_dim, num_layers = 32, 32, 16, 3

    x = jax.random.normal(k_x, (batch, seq, input_dim), jnp.float32)
    params = init_ffn_params(k_p, input_dim, hidden_dim, output_dim, num_layers)
    ref = ffn_reference(x, params)

    # Default path: fused layers, bf16 MXU operands, f32 accumulation, >=2 row tiles.
    out = jax.block_until_ready(ffn_forward(x, params))
    assert out.shape == (batch, seq, output_dim), out.shape
    assert out.dtype == x.dtype, out.dtype
    assert jnp.allclose(out, ref, atol=5e-2, rtol=5e-2), "bf16 fused mismatch vs reference"

    # f32 MXU operands: exact vs reference.
    out_f32 = jax.block_until_ready(ffn_forward(x, params, compute_dtype=jnp.float32))
    assert jnp.allclose(out_f32, ref, atol=1e-5, rtol=1e-5), "f32 fused mismatch vs reference"

    # Weight-streaming fallback path (used automatically when resident weights
    # exceed the per-chip VMEM budget, e.g. very wide layers on v7x).
    out_stream = jax.block_until_ready(
        ffn_forward(x, params, compute_dtype=jnp.float32, mode="stream"))
    assert jnp.allclose(out_stream, ref, atol=1e-5, rtol=1e-5), "stream mismatch vs reference"

    print("KERNEL_OK")
</pallas_src>

<mosaic_0001>
module attributes {stable_mosaic.version = 11 : i64} {
  func.func @_ffn_fused_kernel(%arg0: i32, %arg1: memref<8x128xbf16, #tpu.memory_space<vmem>>, %arg2: memref<128x128xbf16, #tpu.memory_space<vmem>>, %arg3: memref<1x128xf32, #tpu.memory_space<vmem>>, %arg4: memref<128x128xbf16, #tpu.memory_space<vmem>>, %arg5: memref<1x128xf32, #tpu.memory_space<vmem>>, %arg6: memref<128x128xbf16, #tpu.memory_space<vmem>>, %arg7: memref<1x128xf32, #tpu.memory_space<vmem>>, %arg8: memref<8x128xf32, #tpu.memory_space<vmem>>) attributes {dimension_semantics = [#tpu.dimension_semantics<parallel>], iteration_bounds = array<i64: 2>, scalar_prefetch = 0 : i64, scratch_operands = 0 : i64, tpu.core_type = #tpu.core_type<tc>, window_params = [{transform_indices = @transform_0, window_bounds = array<i64: 8, 128>}, {pipeline_mode = #tpu.pipeline_mode<synchronous>, transform_indices = @transform_1, window_bounds = array<i64: 128, 128>}, {pipeline_mode = #tpu.pipeline_mode<synchronous>, transform_indices = @transform_2, window_bounds = array<i64: 1, 128>}, {pipeline_mode = #tpu.pipeline_mode<synchronous>, transform_indices = @transform_3, window_bounds = array<i64: 128, 128>}, {pipeline_mode = #tpu.pipeline_mode<synchronous>, transform_indices = @transform_4, window_bounds = array<i64: 1, 128>}, {pipeline_mode = #tpu.pipeline_mode<synchronous>, transform_indices = @transform_5, window_bounds = array<i64: 128, 128>}, {pipeline_mode = #tpu.pipeline_mode<synchronous>, transform_indices = @transform_6, window_bounds = array<i64: 1, 128>}, {transform_indices = @transform_7, window_bounds = array<i64: 8, 128>}]} {
    %c0 = arith.constant 0 : index
    %c0_0 = arith.constant 0 : index
    %0 = vector.load %arg1[%c0, %c0_0] : memref<8x128xbf16, #tpu.memory_space<vmem>>, vector<8x128xbf16>
    %c0_1 = arith.constant 0 : index
    %c0_2 = arith.constant 0 : index
    %1 = vector.load %arg2[%c0_1, %c0_2] : memref<128x128xbf16, #tpu.memory_space<vmem>>, vector<128x128xbf16>
    %c0_3 = arith.constant 0 : index
    %c0_4 = arith.constant 0 : index
    %2 = vector.load %arg3[%c0_3, %c0_4] : memref<1x128xf32, #tpu.memory_space<vmem>>, vector<1x128xf32>
    %cst = arith.constant dense<0.000000e+00> : vector<8x128xf32>
    %3 = tpu.matmul %0, %1, %cst {dimension_numbers = #tpu.dot_dimension_numbers<[1], [0], [0], [1], [0, 0, 1, 1], [], []>} : vector<8x128xbf16>, vector<128x128xbf16>, vector<8x128xf32> -> vector<8x128xf32>
    %4 = vector.broadcast %2 : vector<1x128xf32> to vector<8x128xf32>
    %5 = arith.addf %3, %4 : vector<8x128xf32>
    %cst_5 = arith.constant 0.000000e+00 : f32
    %6 = vector.broadcast %cst_5 : f32 to vector<8x128xf32>
    %7 = arith.maximumf %5, %6 : vector<8x128xf32>
    %c0_6 = arith.constant 0 : index
    %c0_7 = arith.constant 0 : index
    %8 = vector.load %arg4[%c0_6, %c0_7] : memref<128x128xbf16, #tpu.memory_space<vmem>>, vector<128x128xbf16>
    %c0_8 = arith.constant 0 : index
    %c0_9 = arith.constant 0 : index
    %9 = vector.load %arg5[%c0_8, %c0_9] : memref<1x128xf32, #tpu.memory_space<vmem>>, vector<1x128xf32>
    %10 = arith.truncf %7 : vector<8x128xf32> to vector<8x128xbf16>
    %cst_10 = arith.constant dense<0.000000e+00> : vector<8x128xf32>
    %11 = tpu.matmul %10, %8, %cst_10 {dimension_numbers = #tpu.dot_dimension_numbers<[1], [0], [0], [1], [0, 0, 1, 1], [], []>} : vector<8x128xbf16>, vector<128x128xbf16>, vector<8x128xf32> -> vector<8x128xf32>
    %12 = vector.broadcast %9 : vector<1x128xf32> to vector<8x128xf32>
    %13 = arith.addf %11, %12 : vector<8x128xf32>
    %cst_11 = arith.constant 0.000000e+00 : f32
    %14 = vector.broadcast %cst_11 : f32 to vector<8x128xf32>
    %15 = arith.maximumf %13, %14 : vector<8x128xf32>
    %c0_12 = arith.constant 0 : index
    %c0_13 = arith.constant 0 : index
    %16 = vector.load %arg6[%c0_12, %c0_13] : memref<128x128xbf16, #tpu.memory_space<vmem>>, vector<128x128xbf16>
    %c0_14 = arith.constant 0 : index
    %c0_15 = arith.constant 0 : index
    %17 = vector.load %arg7[%c0_14, %c0_15] : memref<1x128xf32, #tpu.memory_space<vmem>>, vector<1x128xf32>
    %18 = arith.truncf %15 : vector<8x128xf32> to vector<8x128xbf16>
    %cst_16 = arith.constant dense<0.000000e+00> : vector<8x128xf32>
    %19 = tpu.matmul %18, %16, %cst_16 {dimension_numbers = #tpu.dot_dimension_numbers<[1], [0], [0], [1], [0, 0, 1, 1], [], []>} : vector<8x128xbf16>, vector<128x128xbf16>, vector<8x128xf32> -> vector<8x128xf32>
    %20 = vector.broadcast %17 : vector<1x128xf32> to vector<8x128xf32>
    %21 = arith.addf %19, %20 : vector<8x128xf32>
    %c0_17 = arith.constant 0 : index
    %c0_18 = arith.constant 0 : index
    %22 = vector.load %arg8[%c0_17, %c0_18] : memref<8x128xf32, #tpu.memory_space<vmem>>, vector<8x128xf32>
    tpu.vector_store %arg8[%c0_17, %c0_18], %21 {strides = array<i32>} : memref<8x128xf32, #tpu.memory_space<vmem>>, vector<8x128xf32>,
    return
  }
  func.func @transform_0(%arg0: i32) -> (i32, i32) {
    %c0_i32 = arith.constant 0 : i32
    %c0_i32_0 = arith.constant 0 : i32
    return %arg0, %c0_i32 : i32, i32
  }
  func.func @transform_1(%arg0: i32) -> (i32, i32) {
    %c0_i32 = arith.constant 0 : i32
    %c0_i32_0 = arith.constant 0 : i32
    %c0_i32_1 = arith.constant 0 : i32
    return %c0_i32, %c0_i32_0 : i32, i32
  }
  func.func @transform_2(%arg0: i32) -> (i32, i32) {
    %c0_i32 = arith.constant 0 : i32
    %c0_i32_0 = arith.constant 0 : i32
    %c0_i32_1 = arith.constant 0 : i32
    return %c0_i32, %c0_i32_0 : i32, i32
  }
  func.func @transform_3(%arg0: i32) -> (i32, i32) {
    %c0_i32 = arith.constant 0 : i32
    %c0_i32_0 = arith.constant 0 : i32
    %c0_i32_1 = arith.constant 0 : i32
    return %c0_i32, %c0_i32_0 : i32, i32
  }
  func.func @transform_4(%arg0: i32) -> (i32, i32) {
    %c0_i32 = arith.constant 0 : i32
    %c0_i32_0 = arith.constant 0 : i32
    %c0_i32_1 = arith.constant 0 : i32
    return %c0_i32, %c0_i32_0 : i32, i32
  }
  func.func @transform_5(%arg0: i32) -> (i32, i32) {
    %c0_i32 = arith.constant 0 : i32
    %c0_i32_0 = arith.constant 0 : i32
    %c0_i32_1 = arith.constant 0 : i32
    return %c0_i32, %c0_i32_0 : i32, i32
  }
  func.func @transform_6(%arg0: i32) -> (i32, i32) {
    %c0_i32 = arith.constant 0 : i32
    %c0_i32_0 = arith.constant 0 : i32
    %c0_i32_1 = arith.constant 0 : i32
    return %c0_i32, %c0_i32_0 : i32, i32
  }
  func.func @transform_7(%arg0: i32) -> (i32, i32) {
    %c0_i32 = arith.constant 0 : i32
    %c0_i32_0 = arith.constant 0 : i32
    return %arg0, %c0_i32 : i32, i32
  }
}

module attributes {stable_mosaic.version = 11 : i64} {
  func.func @_ffn_fused_kernel(%arg0: i32, %arg1: memref<8x128xbf16, #tpu.memory_space<vmem>>, %arg2: memref<128x128xbf16, #tpu.memory_space<vmem>>, %arg3: memref<1x128xf32, #tpu.memory_space<vmem>>, %arg4: memref<128x128xbf16, #tpu.memory_space<vmem>>, %arg5: memref<1x128xf32, #tpu.memory_space<vmem>>, %arg6: memref<128x128xbf16, #tpu.memory_space<vmem>>, %arg7: memref<1x128xf32, #tpu.memory_space<vmem>>, %arg8: memref<8x128xf32, #tpu.memory_space<vmem>>) attributes {dimension_semantics = [#tpu.dimension_semantics<parallel>], iteration_bounds = array<i64: 2>, scalar_prefetch = 0 : i64, scratch_operands = 0 : i64, tpu.core_type = #tpu.core_type<tc>, window_params = [{transform_indices = @transform_0, window_bounds = array<i64: 8, 128>}, {pipeline_mode = #tpu.pipeline_mode<synchronous>, transform_indices = @transform_1, window_bounds = array<i64: 128, 128>}, {pipeline_mode = #tpu.pipeline_mode<synchronous>, transform_indices = @transform_2, window_bounds = array<i64: 1, 128>}, {pipeline_mode = #tpu.pipeline_mode<synchronous>, transform_indices = @transform_3, window_bounds = array<i64: 128, 128>}, {pipeline_mode = #tpu.pipeline_mode<synchronous>, transform_indices = @transform_4, window_bounds = array<i64: 1, 128>}, {pipeline_mode = #tpu.pipeline_mode<synchronous>, transform_indices = @transform_5, window_bounds = array<i64: 128, 128>}, {pipeline_mode = #tpu.pipeline_mode<synchronous>, transform_indices = @transform_6, window_bounds = array<i64: 1, 128>}, {transform_indices = @transform_7, window_bounds = array<i64: 8, 128>}]} {
    %c0 = arith.constant 0 : index
    %c0_0 = arith.constant 0 : index
    %0 = vector.load %arg1[%c0, %c0_0] : memref<8x128xbf16, #tpu.memory_space<vmem>>, vector<8x128xbf16>
    %c0_1 = arith.constant 0 : index
    %c0_2 = arith.constant 0 : index
    %1 = vector.load %arg2[%c0_1, %c0_2] : memref<128x128xbf16, #tpu.memory_space<vmem>>, vector<128x128xbf16>
    %c0_3 = arith.constant 0 : index
    %c0_4 = arith.constant 0 : index
    %2 = vector.load %arg3[%c0_3, %c0_4] : memref<1x128xf32, #tpu.memory_space<vmem>>, vector<1x128xf32>
    %cst = arith.constant dense<0.000000e+00> : vector<8x128xf32>
    %3 = tpu.matmul %0, %1, %cst {dimension_numbers = #tpu.dot_dimension_numbers<[1], [0], [0], [1], [0, 0, 1, 1], [], []>} : vector<8x128xbf16>, vector<128x128xbf16>, vector<8x128xf32> -> vector<8x128xf32>
    %4 = vector.broadcast %2 : vector<1x128xf32> to vector<8x128xf32>
    %5 = arith.addf %3, %4 : vector<8x128xf32>
    %cst_5 = arith.constant 0.000000e+00 : f32
    %6 = vector.broadcast %cst_5 : f32 to vector<8x128xf32>
    %7 = arith.maximumf %5, %6 : vector<8x128xf32>
    %c0_6 = arith.constant 0 : index
    %c0_7 = arith.constant 0 : index
    %8 = vector.load %arg4[%c0_6, %c0_7] : memref<128x128xbf16, #tpu.memory_space<vmem>>, vector<128x128xbf16>
    %c0_8 = arith.constant 0 : index
    %c0_9 = arith.constant 0 : index
    %9 = vector.load %arg5[%c0_8, %c0_9] : memref<1x128xf32, #tpu.memory_space<vmem>>, vector<1x128xf32>
    %10 = arith.truncf %7 : vector<8x128xf32> to vector<8x128xbf16>
    %cst_10 = arith.constant dense<0.000000e+00> : vector<8x128xf32>
    %11 = tpu.matmul %10, %8, %cst_10 {dimension_numbers = #tpu.dot_dimension_numbers<[1], [0], [0], [1], [0, 0, 1, 1], [], []>} : vector<8x128xbf16>, vector<128x128xbf16>, vector<8x128xf32> -> vector<8x128xf32>
    %12 = vector.broadcast %9 : vector<1x128xf32> to vector<8x128xf32>
    %13 = arith.addf %11, %12 : vector<8x128xf32>
    %cst_11 = arith.constant 0.000000e+00 : f32
    %14 = vector.broadcast %cst_11 : f32 to vector<8x128xf32>
    %15 = arith.maximumf %13, %14 : vector<8x128xf32>
    %c0_12 = arith.constant 0 : index
    %c0_13 = arith.constant 0 : index
    %16 = vector.load %arg6[%c0_12, %c0_13] : memref<128x128xbf16, #tpu.memory_space<vmem>>, vector<128x128xbf16>
    %c0_14 = arith.constant 0 : index
    %c0_15 = arith.constant 0 : index
    %17 = vector.load %arg7[%c0_14, %c0_15] : memref<1x128xf32, #tpu.memory_space<vmem>>, vector<1x128xf32>
    %18 = arith.truncf %15 : vector<8x128xf32> to vector<8x128xbf16>
    %cst_16 = arith.constant dense<0.000000e+00> : vector<8x128xf32>
    %19 = tpu.matmul %18, %16, %cst_16 {dimension_numbers = #tpu.dot_dimension_numbers<[1], [0], [0], [1], [0, 0, 1, 1], [], []>} : vector<8x128xbf16>, vector<128x128xbf16>, vector<8x128xf32> -> vector<8x128xf32>
    %20 = vector.broadcast %17 : vector<1x128xf32> to vector<8x128xf32>
    %21 = arith.addf %19, %20 : vector<8x128xf32>
    %c0_17 = arith.constant 0 : index
    %c0_18 = arith.constant 0 : index
    %22 = vector.load %arg8[%c0_17, %c0_18] : memref<8x128xf32, #tpu.memory_space<vmem>>, vector<8x128xf32>
    tpu.vector_store %arg8[%c0_17, %c0_18], %21 {strides = array<i32>} : memref<8x128xf32, #tpu.memory_space<vmem>>, vector<8x128xf32>,
    return
  }
  func.func @transform_0(%arg0: i32) -> (i32, i32) {
    %c0_i32 = arith.constant 0 : i32
    %c0_i32_0 = arith.constant 0 : i32
    return %arg0, %c0_i32 : i32, i32
  }
  func.func @transform_1(%arg0: i32) -> (i32, i32) {
    %c0_i32 = arith.constant 0 : i32
    %c0_i32_0 = arith.constant 0 : i32
    %c0_i32_1 = arith.constant 0 : i32
    return %c0_i32, %c0_i32_0 : i32, i32
  }
  func.func @transform_2(%arg0: i32) -> (i32, i32) {
    %c0_i32 = arith.constant 0 : i32
    %c0_i32_0 = arith.constant 0 : i32
    %c0_i32_1 = arith.constant 0 : i32
    return %c0_i32, %c0_i32_0 : i32, i32
  }
  func.func @transform_3(%arg0: i32) -> (i32, i32) {
    %c0_i32 = arith.constant 0 : i32
    %c0_i32_0 = arith.constant 0 : i32
    %c0_i32_1 = arith.constant 0 : i32
    return %c0_i32, %c0_i32_0 : i32, i32
  }
  func.func @transform_4(%arg0: i32) -> (i32, i32) {
    %c0_i32 = arith.constant 0 : i32
    %c0_i32_0 = arith.constant 0 : i32
    %c0_i32_1 = arith.constant 0 : i32
    return %c0_i32, %c0_i32_0 : i32, i32
  }
  func.func @transform_5(%arg0: i32) -> (i32, i32) {
    %c0_i32 = arith.constant 0 : i32
    %c0_i32_0 = arith.constant 0 : i32
    %c0_i32_1 = arith.constant 0 : i32
    return %c0_i32, %c0_i32_0 : i32, i32
  }
  func.func @transform_6(%arg0: i32) -> (i32, i32) {
    %c0_i32 = arith.constant 0 : i32
    %c0_i32_0 = arith.constant 0 : i32
    %c0_i32_1 = arith.constant 0 : i32
    return %c0_i32, %c0_i32_0 : i32, i32
  }
  func.func @transform_7(%arg0: i32) -> (i32, i32) {
    %c0_i32 = arith.constant 0 : i32
    %c0_i32_0 = arith.constant 0 : i32
    return %arg0, %c0_i32 : i32, i32
  }
}

</mosaic_0001>

<llo_original>
// kernel: tpu_custom_call.1
$region0: #{tpu_custom_call.1}
  #allocation0 [shape = 'u32[]', space=smem, size = 0x4, offset = 0x4, fixed_abs, tag = 'smem constant byte address 0x4 - core index']
  #allocation1 [shape = 'u32[72,128]{1,0:T(1,128)}', space=vmem, size = 0x9000, scoped, tag = 'internal scratch']
  %s0 = inlined_call_operand.hbm [shape: bf16[16,128], index: 0, kind: input, shape index: {}]
  %s1 = inlined_call_operand.hbm [shape: bf16[128,128], index: 1, kind: input, shape index: {}]
  %s2 = inlined_call_operand.vmem [shape: f32[1,128], index: 2, kind: input, shape index: {}]
  %s3 = inlined_call_operand.hbm [shape: bf16[128,128], index: 3, kind: input, shape index: {}]
  %s4 = inlined_call_operand.vmem [shape: f32[1,128], index: 4, kind: input, shape index: {}]
  %s5 = inlined_call_operand.hbm [shape: bf16[128,128], index: 5, kind: input, shape index: {}]
  %s6 = inlined_call_operand.vmem [shape: f32[1,128], index: 6, kind: input, shape index: {}]
  %s7 = inlined_call_operand.hbm [shape: f32[16,128], index: 7, kind: output, shape index: {}]
  %s8 = sld [smem:[#allocation0]]
  $region77: #{tpu_custom_call.1} parent=0
    _
  %s10 = ssub.s32 1, %s8
  %s11 = scalar_select 0, %s10, %s8
  $region1: #{tpu_custom_call.1} parent=0
    #allocation2 [shape = 'u8[4096]{0}', space=vmem, size = 0x1000, scoped, tag = 'input window, operand 0']
    #allocation3 [shape = 's32[2]{0}', space=sflag, size = 0x8, scoped, tag = 'scoped memory for tpu_custom_call.1']
    #allocation4 [shape = 's32[2]{0}', space=sflag, size = 0x8, scoped, tag = 'scoped memory for tpu_custom_call.1']
    #allocation5 [shape = 'u8[32768]{0}', space=vmem, size = 0x8000, scoped, tag = 'input window, operand 1, single buffered']
    #allocation6 [shape = 's32[1]{0}', space=sflag, size = 0x4, scoped, tag = 'scoped memory for tpu_custom_call.1']
    #allocation7 [shape = 'u8[32768]{0}', space=vmem, size = 0x8000, scoped, tag = 'input window, operand 3, single buffered']
    #allocation8 [shape = 'u8[32768]{0}', space=vmem, size = 0x8000, scoped, tag = 'input window, operand 5, single buffered']
    #allocation9 [shape = 's32[1]{0}', space=sflag, size = 0x4, scoped, tag = 'scoped memory for tpu_custom_call.1']
    #allocation10 [shape = 'u8[8192]{0}', space=vmem, size = 0x2000, scoped, tag = 'output window, operand 0']
    %12 = vsyncpa [#allocation3], 0
    %s13 = scalar_lea.sflag [#allocation3], 1
    %14 = vsyncpa %s13, 0
    %15 = vsyncpa [#allocation6], 0
    %16 = vsyncpa [#allocation9], 0
    %17 = vsyncpa [#allocation4], 0
    %s18 = scalar_lea.sflag [#allocation4], 1
    %19 = vsyncpa %s18, 0
    loop: start=0, step=1, limit=4
    $region2: #{tpu_custom_call.1} parent=1 // loop_pre_header
      _
    $region3: #{tpu_custom_call.1} parent=1 // loop_header
      %s21 = sphi 0, %s25
      %p22 = scmp.ge.s32.totalorder %s21, 4
      %s31 = sphi 0, %s33
      %s34 = sphi 0, %s31
      %s35 = sphi 0, %s34
      %s51 = sphi 0, %s35
      %s55 = sphi 0, %s55
      %s57 = sphi 0, %s55
      %s58 = sphi 0, %s57
      %s72 = sphi 0, %s58
      %s76 = sphi 0, %s76
      %s78 = sphi 0, %s76
      %s79 = sphi 0, %s78
      %s93 = sphi 0, %s79
      %s97 = sphi 0, %s97
      %s99 = sphi 0, %s97
      %s100 = sphi 0, %s99
      %s114 = sphi 0, %s100
      %s118 = sphi 0, %s118
      %s120 = sphi 0, %s118
      %s121 = sphi 0, %s120
      %s135 = sphi 0, %s121
      %s139 = sphi 0, %s139
      %s141 = sphi 0, %s139
      %s142 = sphi 0, %s141
      %s156 = sphi 0, %s142
      %s160 = sphi 0, %s160
      %s162 = sphi 0, %s160
      %s163 = sphi 0, %s162
      %s177 = sphi 0, %s163
      %s183 = sphi 0, %s185
      %s186 = sphi 0, %s183
      %s187 = sphi 0, %s186
      %s203 = sphi 0, %s187
    $region4: #{tpu_custom_call.1} parent=1 // loop_header_branch
      %24 = sbr.rel (%p22) target = $region8
    $region5: #{tpu_custom_call.1} parent=1 // loop_body
      %s26 = ssub.s32 %s21, 1
      %s27 = ssub.s32 %s21, 2
      %s28 = sadd.s32 %s21, 1
      %s29 = ssub.s32 %s21, %s28
      %p30 = scmp.eq.s32.totalorder %s29, 0
      %s32 = sadd.s32 %s31, 1
      %s33 = scalar_select %p30, %s31, %s32
      %p36 = pneg %p30
      %p37 = scmp.eq.s32.totalorder %s21, 1
      %p38 = por %p36, %p37
      %p39 = scmp.ne.s32.totalorder %s31, %s34
      %p40 = scmp.eq.s32.totalorder %s21, 0
      %p41 = por %p39, %p40
      %p42 = scmp.ne.s32.totalorder %s31, %s34
      %p43 = scmp.eq.s32.totalorder %s26, 1
      %p44 = por %p42, %p43
      %p45 = scmp.ne.s32.totalorder %s34, %s35
      %p46 = scmp.eq.s32.totalorder %s26, 0
      %p47 = por %p45, %p46
      %p48 = scmp.ne.s32.totalorder %s34, %s35
      %p49 = scmp.eq.s32.totalorder %s27, 1
      %p50 = por %p48, %p49
      %p52 = scmp.ne.s32.totalorder %s35, %s51
      %p53 = scmp.eq.s32.totalorder %s27, 0
      %p54 = por %p52, %p53
      %s56 = sadd.s32 %s55, 1
      %p59 = scmp.eq.s32.totalorder %s21, 1
      %p60 = scmp.ne.s32.totalorder %s55, %s57
      %p61 = scmp.eq.s32.totalorder %s21, 0
      %p62 = por %p60, %p61
      %p63 = scmp.ne.s32.totalorder %s55, %s57
      %p64 = scmp.eq.s32.totalorder %s26, 1
      %p65 = por %p63, %p64
      %p66 = scmp.ne.s32.totalorder %s57, %s58
      %p67 = scmp.eq.s32.totalorder %s26, 0
      %p68 = por %p66, %p67
      %p69 = scmp.ne.s32.totalorder %s57, %s58
      %p70 = scmp.eq.s32.totalorder %s27, 1
      %p71 = por %p69, %p70
      %p73 = scmp.ne.s32.totalorder %s58, %s72
      %p74 = scmp.eq.s32.totalorder %s27, 0
      %p75 = por %p73, %p74
      %s77 = sadd.s32 %s76, 1
      %p80 = scmp.eq.s32.totalorder %s21, 1
      %p81 = scmp.ne.s32.totalorder %s76, %s78
      %p82 = scmp.eq.s32.totalorder %s21, 0
      %p83 = por %p81, %p82
      %p84 = scmp.ne.s32.totalorder %s76, %s78
      %p85 = scmp.eq.s32.totalorder %s26, 1
      %p86 = por %p84, %p85
      %p87 = scmp.ne.s32.totalorder %s78, %s79
      %p88 = scmp.eq.s32.totalorder %s26, 0
      %p89 = por %p87, %p88
      %p90 = scmp.ne.s32.totalorder %s78, %s79
      %p91 = scmp.eq.s32.totalorder %s27, 1
      %p92 = por %p90, %p91
      %p94 = scmp.ne.s32.totalorder %s79, %s93
      %p95 = scmp.eq.s32.totalorder %s27, 0
      %p96 = por %p94, %p95
      %s98 = sadd.s32 %s97, 1
      %p101 = scmp.eq.s32.totalorder %s21, 1
      %p102 = scmp.ne.s32.totalorder %s97, %s99
      %p103 = scmp.eq.s32.totalorder %s21, 0
      %p104 = por %p102, %p103
      %p105 = scmp.ne.s32.totalorder %s97, %s99
      %p106 = scmp.eq.s32.totalorder %s26, 1
      %p107 = por %p105, %p106
      %p108 = scmp.ne.s32.totalorder %s99, %s100
      %p109 = scmp.eq.s32.totalorder %s26, 0
      %p110 = por %p108, %p109
      %p111 = scmp.ne.s32.totalorder %s99, %s100
      %p112 = scmp.eq.s32.totalorder %s27, 1
      %p113 = por %p111, %p112
      %p115 = scmp.ne.s32.totalorder %s100, %s114
      %p116 = scmp.eq.s32.totalorder %s27, 0
      %p117 = por %p115, %p116
      %s119 = sadd.s32 %s118, 1
      %p122 = scmp.eq.s32.totalorder %s21, 1
      %p123 = scmp.ne.s32.totalorder %s118, %s120
      %p124 = scmp.eq.s32.totalorder %s21, 0
      %p125 = por %p123, %p124
      %p126 = scmp.ne.s32.totalorder %s118, %s120
      %p127 = scmp.eq.s32.totalorder %s26, 1
      %p128 = por %p126, %p127
      %p129 = scmp.ne.s32.totalorder %s120, %s121
      %p130 = scmp.eq.s32.totalorder %s26, 0
      %p131 = por %p129, %p130
      %p132 = scmp.ne.s32.totalorder %s120, %s121
      %p133 = scmp.eq.s32.totalorder %s27, 1
      %p134 = por %p132, %p133
      %p136 = scmp.ne.s32.totalorder %s121, %s135
      %p137 = scmp.eq.s32.totalorder %s27, 0
      %p138 = por %p136, %p137
      %s140 = sadd.s32 %s139, 1
      %p143 = scmp.eq.s32.totalorder %s21, 1
      %p144 = scmp.ne.s32.totalorder %s139, %s141
      %p145 = scmp.eq.s32.totalorder %s21, 0
      %p146 = por %p144, %p145
      %p147 = scmp.ne.s32.totalorder %s139, %s141
      %p148 = scmp.eq.s32.totalorder %s26, 1
      %p149 = por %p147, %p148
      %p150 = scmp.ne.s32.totalorder %s141, %s142
      %p151 = scmp.eq.s32.totalorder %s26, 0
      %p152 = por %p150, %p151
      %p153 = scmp.ne.s32.totalorder %s141, %s142
      %p154 = scmp.eq.s32.totalorder %s27, 1
      %p155 = por %p153, %p154
      %p157 = scmp.ne.s32.totalorder %s142, %s156
      %p158 = scmp.eq.s32.totalorder %s27, 0
      %p159 = por %p157, %p158
      %s161 = sadd.s32 %s160, 1
      %p164 = scmp.eq.s32.totalorder %s21, 1
      %p165 = scmp.ne.s32.totalorder %s160, %s162
      %p166 = scmp.eq.s32.totalorder %s21, 0
      %p167 = por %p165, %p166
      %p168 = scmp.ne.s32.totalorder %s160, %s162
      %p169 = scmp.eq.s32.totalorder %s26, 1
      %p170 = por %p168, %p169
      %p171 = scmp.ne.s32.totalorder %s162, %s163
      %p172 = scmp.eq.s32.totalorder %s26, 0
      %p173 = por %p171, %p172
      %p174 = scmp.ne.s32.totalorder %s162, %s163
      %p175 = scmp.eq.s32.totalorder %s27, 1
      %p176 = por %p174, %p175
      %p178 = scmp.ne.s32.totalorder %s163, %s177
      %p179 = scmp.eq.s32.totalorder %s27, 0
      %p180 = por %p178, %p179
      %s181 = ssub.s32 %s21, %s28
      %p182 = scmp.eq.s32.totalorder %s181, 0
      %s184 = sadd.s32 %s183, 1
      %s185 = scalar_select %p182, %s183, %s184
      %p188 = pneg %p182
      %p189 = scmp.eq.s32.totalorder %s21, 1
      %p190 = por %p188, %p189
      %p191 = scmp.ne.s32.totalorder %s183, %s186
      %p192 = scmp.eq.s32.totalorder %s21, 0
      %p193 = por %p191, %p192
      %p194 = scmp.ne.s32.totalorder %s183, %s186
      %p195 = scmp.eq.s32.totalorder %s26, 1
      %p196 = por %p194, %p195
      %p197 = scmp.ne.s32.totalorder %s186, %s187
      %p198 = scmp.eq.s32.totalorder %s26, 0
      %p199 = por %p197, %p198
      %p200 = scmp.ne.s32.totalorder %s186, %s187
      %p201 = scmp.eq.s32.totalorder %s27, 1
      %p202 = por %p200, %p201
      %p204 = scmp.ne.s32.totalorder %s187, %s203
      %p205 = scmp.eq.s32.totalorder %s27, 0
      %p206 = por %p204, %p205
      %p207 = scmp.le.s32.totalorder 1, %s21
      %p208 = scmp.lt.s32.totalorder %s21, 3
      %p209 = pnand %p207, %p208
      %p210 = pneg %p209
      // Predicated region
      $region9: #{tpu_custom_call.1} parent=5 // pred_check
        _
      $region10: #{tpu_custom_call.1} parent=5 // pred_check_branch
        %212 = sbr.rel (%p209) target = $region12
      $region11: #{tpu_custom_call.1} parent=5 // pred_region
        %s213 = ssub.s32 %s21, 1
        // Predicated region
        $region13: #{tpu_custom_call.1} parent=11 // pred_check
          %p214 = pneg %p68
        $region14: #{tpu_custom_call.1} parent=11 // pred_check_branch
          %216 = sbr.rel (%p214) target = $region16
        $region15: #{tpu_custom_call.1} parent=11 // pred_region
          %218 = vsyncadd [#allocation6], 0
          %s219 = sshll.u32 %s1, 4
          %s220 = int_to_ptr.hbm [resolvable:$true] %s219
          %s221 = sshll.u32 [#allocation5], 4
          %s222 = int_to_ptr.vmem [resolvable:$true] %s221
          %227 = dma.hbm_to_vmem [thread:$0]  %s220, 1024, %s222, [#allocation6], 64, 64, 4
        $region16: #{tpu_custom_call.1} parent=11 // pred_fallthru
          _
        // Predicated region
        $region17: #{tpu_custom_call.1} parent=11 // pred_check
          %p228 = pneg %p89
        $region18: #{tpu_custom_call.1} parent=11 // pred_check_branch
          %230 = sbr.rel (%p228) target = $region20
        $region19: #{tpu_custom_call.1} parent=11 // pred_region
          _
        $region20: #{tpu_custom_call.1} parent=11 // pred_fallthru
          _
        // Predicated region
        $region21: #{tpu_custom_call.1} parent=11 // pred_check
          %p231 = pneg %p110
        $region22: #{tpu_custom_call.1} parent=11 // pred_check_branch
          %233 = sbr.rel (%p231) target = $region24
        $region23: #{tpu_custom_call.1} parent=11 // pred_region
          %235 = vsyncadd [#allocation6], 0
          %s236 = sshll.u32 %s3, 4
          %s237 = int_to_ptr.hbm [resolvable:$true] %s236
          %s238 = sshll.u32 [#allocation7], 4
          %s239 = int_to_ptr.vmem [resolvable:$true] %s238
          %244 = dma.hbm_to_vmem [thread:$0]  %s237, 1024, %s239, [#allocation6], 64, 64, 4
        $region24: #{tpu_custom_call.1} parent=11 // pred_fallthru
          _
        // Predicated region
        $region25: #{tpu_custom_call.1} parent=11 // pred_check
          %p245 = pneg %p131
        $region26: #{tpu_custom_call.1} parent=11 // pred_check_branch
          %247 = sbr.rel (%p245) target = $region28
        $region27: #{tpu_custom_call.1} parent=11 // pred_region
          _
        $region28: #{tpu_custom_call.1} parent=11 // pred_fallthru
          _
        // Predicated region
        $region29: #{tpu_custom_call.1} parent=11 // pred_check
          %p248 = pneg %p152
        $region30: #{tpu_custom_call.1} parent=11 // pred_check_branch
          %250 = sbr.rel (%p248) target = $region32
        $region31: #{tpu_custom_call.1} parent=11 // pred_region
          %252 = vsyncadd [#allocation9], 0
          %s253 = sshll.u32 %s5, 4
          %s254 = int_to_ptr.hbm [resolvable:$true] %s253
          %s255 = sshll.u32 [#allocation8], 4
          %s256 = int_to_ptr.vmem [resolvable:$true] %s255
          %261 = dma.hbm_to_vmem [thread:$0]  %s254, 1024, %s256, [#allocation9], 64, 64, 4
        $region32: #{tpu_custom_call.1} parent=11 // pred_fallthru
          _
        // Predicated region
        $region33: #{tpu_custom_call.1} parent=11 // pred_check
          %p262 = pneg %p173
        $region34: #{tpu_custom_call.1} parent=11 // pred_check_branch
          %264 = sbr.rel (%p262) target = $region36
        $region35: #{tpu_custom_call.1} parent=11 // pred_region
          _
        $region36: #{tpu_custom_call.1} parent=11 // pred_fallthru
          _
      $region12: #{tpu_custom_call.1} parent=5 // pred_fallthru
        _
      %p265 = scmp.lt.s32.totalorder %s21, 2
      // Predicated region
      $region37: #{tpu_custom_call.1} parent=5 // pred_check
        %p266 = pneg %p265
      $region38: #{tpu_custom_call.1} parent=5 // pred_check_branch
        %268 = sbr.rel (%p266) target = $region40
      $region39: #{tpu_custom_call.1} parent=5 // pred_region
        // Predicated region
        $region41: #{tpu_custom_call.1} parent=39 // pred_check
          %p269 = pneg %p41
        $region42: #{tpu_custom_call.1} parent=39 // pred_check_branch
          %271 = sbr.rel (%p269) target = $region44
        $region43: #{tpu_custom_call.1} parent=39 // pred_region
          %s272 = sand.u32 %s31, 1
          %s273 = scalar_lea.sflag [#allocation3], %s272
          %s274 = sand.u32 %s31, 1
          %s275 = smul.addr %s274, 4
          %s276 = scalar_lea.vmem [#allocation2], %s275
          %278 = vsyncadd %s273, 0
          %s279 = smul.addr %s21, 4
          %s280 = scalar_lea.hbm %s0, %s279
          %s282 = sshll.u32 %s280, 4
          %s283 = int_to_ptr.hbm [resolvable:$true] %s282
          %s284 = sshll.u32 %s276, 4
          %s285 = int_to_ptr.vmem [resolvable:$true] %s284
          %287 = dma.hbm_to_vmem [thread:$0]  %s283, 64, %s285, %s273
        $region44: #{tpu_custom_call.1} parent=39 // pred_fallthru
          _
      $region40: #{tpu_custom_call.1} parent=5 // pred_fallthru
        _
      %p288 = scmp.le.s32.totalorder 1, %s21
      %p289 = scmp.lt.s32.totalorder %s21, 3
      %p290 = pnand %p288, %p289
      %p291 = pneg %p290
      // Predicated region
      $region45: #{tpu_custom_call.1} parent=5 // pred_check
        _
      $region46: #{tpu_custom_call.1} parent=5 // pred_check_branch
        %293 = sbr.rel (%p290) target = $region48
      $region47: #{tpu_custom_call.1} parent=5 // pred_region
        %s294 = ssub.s32 %s21, 1
        %s295 = sand.u32 %s34, 1
        %s296 = scalar_lea.sflag [#allocation3], %s295
        %s297 = sand.u32 %s34, 1
        %s298 = smul.addr %s297, 4
        %s299 = scalar_lea.vmem [#allocation2], %s298
        // Predicated region
        $region49: #{tpu_custom_call.1} parent=47 // pred_check
          %p300 = pneg %p47
        $region50: #{tpu_custom_call.1} parent=47 // pred_check_branch
          %302 = sbr.rel (%p300) target = $region52
        $region51: #{tpu_custom_call.1} parent=47 // pred_region
          %304 = dma.done %s296, 64
        $region52: #{tpu_custom_call.1} parent=47 // pred_fallthru
          _
        // Predicated region
        $region53: #{tpu_custom_call.1} parent=47 // pred_check
          %p305 = pneg %p68
        $region54: #{tpu_custom_call.1} parent=47 // pred_check_branch
          %307 = sbr.rel (%p305) target = $region56
        $region55: #{tpu_custom_call.1} parent=47 // pred_region
          %309 = dma.done [#allocation6], 1024
        $region56: #{tpu_custom_call.1} parent=47 // pred_fallthru
          _
        // Predicated region
        $region57: #{tpu_custom_call.1} parent=47 // pred_check
          %p310 = pneg %p110
        $region58: #{tpu_custom_call.1} parent=47 // pred_check_branch
          %312 = sbr.rel (%p310) target = $region60
        $region59: #{tpu_custom_call.1} parent=47 // pred_region
          %314 = dma.done [#allocation6], 1024
        $region60: #{tpu_custom_call.1} parent=47 // pred_fallthru
          _
        // Predicated region
        $region61: #{tpu_custom_call.1} parent=47 // pred_check
          %p315 = pneg %p152
        $region62: #{tpu_custom_call.1} parent=47 // pred_check_branch
          %317 = sbr.rel (%p315) target = $region64
        $region63: #{tpu_custom_call.1} parent=47 // pred_region
          %319 = dma.done [#allocation9], 1024
        $region64: #{tpu_custom_call.1} parent=47 // pred_fallthru
          _
        %s320 = sand.u32 %s34, 1
        %s321 = scalar_lea.sflag [#allocation3], %s320
        %s322 = sand.u32 %s34, 1
        %s323 = smul.addr %s322, 4
        %s324 = scalar_lea.vmem [#allocation2], %s323
        %p325 = pneg %p47
        %p326 = pneg %p44
        %p327 = pneg %p68
        %p328 = pneg %p65
        %p329 = pneg %p89
        %p330 = pneg %p86
        %p331 = pneg %p110
        %p332 = pneg %p107
        %p333 = pneg %p131
        %p334 = pneg %p128
        %p335 = pneg %p152
        %p336 = pneg %p149
        %p337 = pneg %p173
        %p338 = pneg %p170
        %p339 = pneg %p199
        %p340 = pneg %p196
        %s341 = sand.u32 %s186, 1
        %s342 = scalar_lea.sflag [#allocation4], %s341
        %s343 = sand.u32 %s186, 1
        %s344 = smul.addr %s343, 8
        %s345 = scalar_lea.vmem [#allocation10], %s344
        %v346 = vld [vmem:[%s299] sm:$0xf]
        %v347 = vld [vmem:[#allocation5] sm:$0xf]
        %v348 = vld [vmem:[#allocation5 + $0x4] sm:$0xf]
        %v349 = vld [vmem:[#allocation5 + $0x8] sm:$0xf]
        %v350 = vld [vmem:[#allocation5 + $0xc] sm:$0xf]
        %v351 = vld [vmem:[#allocation5 + $0x10] sm:$0xf]
        %v352 = vld [vmem:[#allocation5 + $0x14] sm:$0xf]
        %v353 = vld [vmem:[#allocation5 + $0x18] sm:$0xf]
        %v354 = vld [vmem:[#allocation5 + $0x1c] sm:$0xf]
        %v355 = vld [vmem:[#allocation5 + $0x20] sm:$0xf]
        %v356 = vld [vmem:[#allocation5 + $0x24] sm:$0xf]
        %v357 = vld [vmem:[#allocation5 + $0x28] sm:$0xf]
        %v358 = vld [vmem:[#allocation5 + $0x2c] sm:$0xf]
        %v359 = vld [vmem:[#allocation5 + $0x30] sm:$0xf]
        %v360 = vld [vmem:[#allocation5 + $0x34] sm:$0xf]
        %v361 = vld [vmem:[#allocation5 + $0x38] sm:$0xf]
        %v362 = vld [vmem:[#allocation5 + $0x3c] sm:$0xf]
        %v363 = vld [vmem:[%s2] sm:$0x1]
        %v365 = vperm.slane %v363, 0
        %v383 = vunpack.c.l.b16 %v347
        %v384 = vunpack.c.l.b16 %v348
        %v385 = vunpack.c.l.b16 %v349
        %v386 = vunpack.c.l.b16 %v350
        %v387 = vunpack.c.l.b16 %v351
        %v388 = vunpack.c.l.b16 %v352
        %v389 = vunpack.c.l.b16 %v353
        %v390 = vunpack.c.l.b16 %v354
        %v391 = vunpack.c.l.b16 %v355
        %v392 = vunpack.c.l.b16 %v356
        %v393 = vunpack.c.l.b16 %v357
        %v394 = vunpack.c.l.b16 %v358
        %v395 = vunpack.c.l.b16 %v359
        %v396 = vunpack.c.l.b16 %v360
        %v397 = vunpack.c.l.b16 %v361
        %v398 = vunpack.c.l.b16 %v362
        %v399 = vpack.c.b16 %v384, %v383
        %v400 = vpack.c.b16 %v386, %v385
        %v401 = vpack.c.b16 %v388, %v387
        %v402 = vpack.c.b16 %v390, %v389
        %v403 = vpack.c.b16 %v392, %v391
        %v404 = vpack.c.b16 %v394, %v393
        %v405 = vpack.c.b16 %v396, %v395
        %v406 = vpack.c.b16 %v398, %v397
        %415 = vmatpush.bf16.msra.mxu0 %v406
        %416 = vmatpush.bf16.msra.mxu0 %v405
        %417 = vmatpush.bf16.msra.mxu0 %v404
        %418 = vmatpush.bf16.msra.mxu0 %v403
        %419 = vmatpush.bf16.msra.mxu0 %v402
        %420 = vmatpush.bf16.msra.mxu0 %v401
        %421 = vmatpush.bf16.msra.mxu0 %v400
        %422 = vmatpush.bf16.msra.mxu0 %v399
        %423 = vmatmul.bf16.gmra.mxu0 %v346
        %v424 = vpop.f32.mrf.mxu0
        %v425 = vadd.f32 %v365, %v424
        %v426 = vpop.f32.mrf.mxu0
        %427 = vdwg.mxu0
        %v428 = vmax.f32 %v425, 0.0
        %v429 = vld [vmem:[#allocation7] sm:$0xf]
        %v430 = vld [vmem:[#allocation7 + $0x4] sm:$0xf]
        %v431 = vld [vmem:[#allocation7 + $0x8] sm:$0xf]
        %v432 = vld [vmem:[#allocation7 + $0xc] sm:$0xf]
        %v433 = vld [vmem:[#allocation7 + $0x10] sm:$0xf]
        %v434 = vld [vmem:[#allocation7 + $0x14] sm:$0xf]
        %v435 = vld [vmem:[#allocation7 + $0x18] sm:$0xf]
        %v436 = vld [vmem:[#allocation7 + $0x1c] sm:$0xf]
        %v437 = vld [vmem:[#allocation7 + $0x20] sm:$0xf]
        %v438 = vld [vmem:[#allocation7 + $0x24] sm:$0xf]
        %v439 = vld [vmem:[#allocation7 + $0x28] sm:$0xf]
        %v440 = vld [vmem:[#allocation7 + $0x2c] sm:$0xf]
        %v441 = vld [vmem:[#allocation7 + $0x30] sm:$0xf]
        %v442 = vld [vmem:[#allocation7 + $0x34] sm:$0xf]
        %v443 = vld [vmem:[#allocation7 + $0x38] sm:$0xf]
        %v444 = vld [vmem:[#allocation7 + $0x3c] sm:$0xf]
        %v445 = vld [vmem:[%s4] sm:$0x1]
        %v446 = vpack.c.bf16 %v428, %v428
        %v448 = vperm.slane %v445, 0
        %v466 = vunpack.c.l.b16 %v429
        %v467 = vunpack.c.l.b16 %v430
        %v468 = vunpack.c.l.b16 %v431
        %v469 = vunpack.c.l.b16 %v432
        %v470 = vunpack.c.l.b16 %v433
        %v471 = vunpack.c.l.b16 %v434
        %v472 = vunpack.c.l.b16 %v435
        %v473 = vunpack.c.l.b16 %v436
        %v474 = vunpack.c.l.b16 %v437
        %v475 = vunpack.c.l.b16 %v438
        %v476 = vunpack.c.l.b16 %v439
        %v477 = vunpack.c.l.b16 %v440
        %v478 = vunpack.c.l.b16 %v441
        %v479 = vunpack.c.l.b16 %v442
        %v480 = vunpack.c.l.b16 %v443
        %v481 = vunpack.c.l.b16 %v444
        %v482 = vpack.c.b16 %v467, %v466
        %v483 = vpack.c.b16 %v469, %v468
        %v484 = vpack.c.b16 %v471, %v470
        %v485 = vpack.c.b16 %v473, %v472
        %v486 = vpack.c.b16 %v475, %v474
        %v487 = vpack.c.b16 %v477, %v476
        %v488 = vpack.c.b16 %v479, %v478
        %v489 = vpack.c.b16 %v481, %v480
        %498 = vmatpush.bf16.msra.mxu0 %v489
        %499 = vmatpush.bf16.msra.mxu0 %v488
        %500 = vmatpush.bf16.msra.mxu0 %v487
        %501 = vmatpush.bf16.msra.mxu0 %v486
        %502 = vmatpush.bf16.msra.mxu0 %v485
        %503 = vmatpush.bf16.msra.mxu0 %v484
        %504 = vmatpush.bf16.msra.mxu0 %v483
        %505 = vmatpush.bf16.msra.mxu0 %v482
        %506 = vmatmul.bf16.gmra.mxu0 %v446
        %v507 = vpop.f32.mrf.mxu0
        %v508 = vadd.f32 %v448, %v507
        %v509 = vpop.f32.mrf.mxu0
        %510 = vdwg.mxu0
        %v511 = vmax.f32 %v508, 0.0
        %v512 = vld [vmem:[#allocation8] sm:$0xf]
        %v513 = vld [vmem:[#allocation8 + $0x4] sm:$0xf]
        %v514 = vld [vmem:[#allocation8 + $0x8] sm:$0xf]
        %v515 = vld [vmem:[#allocation8 + $0xc] sm:$0xf]
        %v516 = vld [vmem:[#allocation8 + $0x10] sm:$0xf]
        %v517 = vld [vmem:[#allocation8 + $0x14] sm:$0xf]
        %v518 = vld [vmem:[#allocation8 + $0x18] sm:$0xf]
        %v519 = vld [vmem:[#allocation8 + $0x1c] sm:$0xf]
        %v520 = vld [vmem:[#allocation8 + $0x20] sm:$0xf]
        %v521 = vld [vmem:[#allocation8 + $0x24] sm:$0xf]
        %v522 = vld [vmem:[#allocation8 + $0x28] sm:$0xf]
        %v523 = vld [vmem:[#allocation8 + $0x2c] sm:$0xf]
        %v524 = vld [vmem:[#allocation8 + $0x30] sm:$0xf]
        %v525 = vld [vmem:[#allocation8 + $0x34] sm:$0xf]
        %v526 = vld [vmem:[#allocation8 + $0x38] sm:$0xf]
        %v527 = vld [vmem:[#allocation8 + $0x3c] sm:$0xf]
        %v528 = vld [vmem:[%s6] sm:$0x1]
        %v529 = vpack.c.bf16 %v511, %v511
        %v531 = vperm.slane %v528, 0
        %v549 = vunpack.c.l.b16 %v512
        %v550 = vunpack.c.l.b16 %v513
        %v551 = vunpack.c.l.b16 %v514
        %v552 = vunpack.c.l.b16 %v515
        %v553 = vunpack.c.l.b16 %v516
        %v554 = vunpack.c.l.b16 %v517
        %v555 = vunpack.c.l.b16 %v518
        %v556 = vunpack.c.l.b16 %v519
        %v557 = vunpack.c.l.b16 %v520
        %v558 = vunpack.c.l.b16 %v521
        %v559 = vunpack.c.l.b16 %v522
        %v560 = vunpack.c.l.b16 %v523
        %v561 = vunpack.c.l.b16 %v524
        %v562 = vunpack.c.l.b16 %v525
        %v563 = vunpack.c.l.b16 %v526
        %v564 = vunpack.c.l.b16 %v527
        %v565 = vpack.c.b16 %v550, %v549
        %v566 = vpack.c.b16 %v552, %v551
        %v567 = vpack.c.b16 %v554, %v553
        %v568 = vpack.c.b16 %v556, %v555
        %v569 = vpack.c.b16 %v558, %v557
        %v570 = vpack.c.b16 %v560, %v559
        %v571 = vpack.c.b16 %v562, %v561
        %v572 = vpack.c.b16 %v564, %v563
        %581 = vmatpush.bf16.msra.mxu0 %v572
        %582 = vmatpush.bf16.msra.mxu0 %v571
        %583 = vmatpush.bf16.msra.mxu0 %v570
        %584 = vmatpush.bf16.msra.mxu0 %v569
        %585 = vmatpush.bf16.msra.mxu0 %v568
        %586 = vmatpush.bf16.msra.mxu0 %v567
        %587 = vmatpush.bf16.msra.mxu0 %v566
        %588 = vmatpush.bf16.msra.mxu0 %v565
        %589 = vmatmul.bf16.gmra.mxu0 %v529
        %v590 = vpop.f32.mrf.mxu0
        %v591 = vadd.f32 %v531, %v590
        %v592 = vpop.f32.mrf.mxu0
        %593 = vdwg.mxu0
        %594 = vst [vmem:[%s345] sm:$0xff] %v591
        %s595 = sand.u32 %s186, 1
        %s596 = scalar_lea.sflag [#allocation4], %s595
        %s597 = sand.u32 %s186, 1
        %s598 = smul.addr %s597, 8
        %s599 = scalar_lea.vmem [#allocation10], %s598
        // Predicated region
        $region65: #{tpu_custom_call.1} parent=47 // pred_check
          %p600 = pneg %p196
        $region66: #{tpu_custom_call.1} parent=47 // pred_check_branch
          %602 = sbr.rel (%p600) target = $region68
        $region67: #{tpu_custom_call.1} parent=47 // pred_region
          %604 = vsyncadd %s596, 0
          %s605 = smul.addr %s26, 8
          %s606 = scalar_lea.hbm %s7, %s605
          %s608 = sshll.u32 %s599, 4
          %s609 = int_to_ptr.vmem [resolvable:$true] %s608
          %s610 = sshll.u32 %s606, 4
          %s611 = int_to_ptr.hbm [resolvable:$true] %s610
          %613 = dma.vmem_to_hbm [thread:$0]  %s609, 128, %s611, %s596
        $region68: #{tpu_custom_call.1} parent=47 // pred_fallthru
          _
      $region48: #{tpu_custom_call.1} parent=5 // pred_fallthru
        _
      %p614 = scmp.le.s32.totalorder 2, %s21
      // Predicated region
      $region69: #{tpu_custom_call.1} parent=5 // pred_check
        %p615 = pneg %p614
      $region70: #{tpu_custom_call.1} parent=5 // pred_check_branch
        %617 = sbr.rel (%p615) target = $region72
      $region71: #{tpu_custom_call.1} parent=5 // pred_region
        %s618 = ssub.s32 %s21, 2
        // Predicated region
        $region73: #{tpu_custom_call.1} parent=71 // pred_check
          %p619 = pneg %p202
        $region74: #{tpu_custom_call.1} parent=71 // pred_check_branch
          %621 = sbr.rel (%p619) target = $region76
        $region75: #{tpu_custom_call.1} parent=71 // pred_region
          %s622 = sand.u32 %s187, 1
          %s623 = scalar_lea.sflag [#allocation4], %s622
          %s624 = sand.u32 %s187, 1
          %s625 = smul.addr %s624, 8
          %s626 = scalar_lea.vmem [#allocation10], %s625
          %628 = dma.done %s623, 128
        $region76: #{tpu_custom_call.1} parent=71 // pred_fallthru
          _
      $region72: #{tpu_custom_call.1} parent=5 // pred_fallthru
        _
    $region6: #{tpu_custom_call.1} parent=1 // loop_footer
      %s25 = sadd.s32 1, %s21
    $region7: #{tpu_custom_call.1} parent=1 // loop_footer_branch
      %20 = sbr.rel target = $region3
    $region8: #{tpu_custom_call.1} parent=1 // loop_exit
      _
    %629 = vsyncpa [#allocation3], 1
    %s630 = scalar_lea.sflag [#allocation3], 1
    %631 = vsyncpa %s630, 1
    %632 = vsyncpa [#allocation6], 1
    %633 = vsyncpa [#allocation9], 1
    %634 = vsyncpa [#allocation4], 1
    %s635 = scalar_lea.sflag [#allocation4], 1
    %636 = vsyncpa %s635, 1

// kernel: tpu_custom_call.1
$region0: #{tpu_custom_call.1}
  #allocation0 [shape = 'u32[]', space=smem, size = 0x4, offset = 0x4, fixed_abs, tag = 'smem constant byte address 0x4 - core index']
  #allocation1 [shape = 'u32[72,128]{1,0:T(1,128)}', space=vmem, size = 0x9000, scoped, tag = 'internal scratch']
  %s0 = inlined_call_operand.hbm [shape: bf16[16,128], index: 0, kind: input, shape index: {}]
  %s1 = inlined_call_operand.hbm [shape: bf16[128,128], index: 1, kind: input, shape index: {}]
  %s2 = inlined_call_operand.vmem [shape: f32[1,128], index: 2, kind: input, shape index: {}]
  %s3 = inlined_call_operand.hbm [shape: bf16[128,128], index: 3, kind: input, shape index: {}]
  %s4 = inlined_call_operand.vmem [shape: f32[1,128], index: 4, kind: input, shape index: {}]
  %s5 = inlined_call_operand.hbm [shape: bf16[128,128], index: 5, kind: input, shape index: {}]
  %s6 = inlined_call_operand.vmem [shape: f32[1,128], index: 6, kind: input, shape index: {}]
  %s7 = inlined_call_operand.hbm [shape: f32[16,128], index: 7, kind: output, shape index: {}]
  %s8 = sld [smem:[#allocation0]]
  $region77: #{tpu_custom_call.1} parent=0
    _
  %s10 = ssub.s32 1, %s8
  %s11 = scalar_select 0, %s10, %s8
  $region1: #{tpu_custom_call.1} parent=0
    #allocation2 [shape = 'u8[4096]{0}', space=vmem, size = 0x1000, scoped, tag = 'input window, operand 0']
    #allocation3 [shape = 's32[2]{0}', space=sflag, size = 0x8, scoped, tag = 'scoped memory for tpu_custom_call.1']
    #allocation4 [shape = 's32[2]{0}', space=sflag, size = 0x8, scoped, tag = 'scoped memory for tpu_custom_call.1']
    #allocation5 [shape = 'u8[32768]{0}', space=vmem, size = 0x8000, scoped, tag = 'input window, operand 1, single buffered']
    #allocation6 [shape = 's32[1]{0}', space=sflag, size = 0x4, scoped, tag = 'scoped memory for tpu_custom_call.1']
    #allocation7 [shape = 'u8[32768]{0}', space=vmem, size = 0x8000, scoped, tag = 'input window, operand 3, single buffered']
    #allocation8 [shape = 'u8[32768]{0}', space=vmem, size = 0x8000, scoped, tag = 'input window, operand 5, single buffered']
    #allocation9 [shape = 's32[1]{0}', space=sflag, size = 0x4, scoped, tag = 'scoped memory for tpu_custom_call.1']
    #allocation10 [shape = 'u8[8192]{0}', space=vmem, size = 0x2000, scoped, tag = 'output window, operand 0']
    %12 = vsyncpa [#allocation3], 0
    %s13 = scalar_lea.sflag [#allocation3], 1
    %14 = vsyncpa %s13, 0
    %15 = vsyncpa [#allocation6], 0
    %16 = vsyncpa [#allocation9], 0
    %17 = vsyncpa [#allocation4], 0
    %s18 = scalar_lea.sflag [#allocation4], 1
    %19 = vsyncpa %s18, 0
    loop: start=0, step=1, limit=4
    $region2: #{tpu_custom_call.1} parent=1 // loop_pre_header
      _
    $region3: #{tpu_custom_call.1} parent=1 // loop_header
      %s21 = sphi 0, %s25
      %p22 = scmp.ge.s32.totalorder %s21, 4
      %s31 = sphi 0, %s33
      %s34 = sphi 0, %s31
      %s35 = sphi 0, %s34
      %s51 = sphi 0, %s35
      %s55 = sphi 0, %s55
      %s57 = sphi 0, %s55
      %s58 = sphi 0, %s57
      %s72 = sphi 0, %s58
      %s76 = sphi 0, %s76
      %s78 = sphi 0, %s76
      %s79 = sphi 0, %s78
      %s93 = sphi 0, %s79
      %s97 = sphi 0, %s97
      %s99 = sphi 0, %s97
      %s100 = sphi 0, %s99
      %s114 = sphi 0, %s100
      %s118 = sphi 0, %s118
      %s120 = sphi 0, %s118
      %s121 = sphi 0, %s120
      %s135 = sphi 0, %s121
      %s139 = sphi 0, %s139
      %s141 = sphi 0, %s139
      %s142 = sphi 0, %s141
      %s156 = sphi 0, %s142
      %s160 = sphi 0, %s160
      %s162 = sphi 0, %s160
      %s163 = sphi 0, %s162
      %s177 = sphi 0, %s163
      %s183 = sphi 0, %s185
      %s186 = sphi 0, %s183
      %s187 = sphi 0, %s186
      %s203 = sphi 0, %s187
    $region4: #{tpu_custom_call.1} parent=1 // loop_header_branch
      %24 = sbr.rel (%p22) target = $region8
    $region5: #{tpu_custom_call.1} parent=1 // loop_body
      %s26 = ssub.s32 %s21, 1
      %s27 = ssub.s32 %s21, 2
      %s28 = sadd.s32 %s21, 1
      %s29 = ssub.s32 %s21, %s28
      %p30 = scmp.eq.s32.totalorder %s29, 0
      %s32 = sadd.s32 %s31, 1
      %s33 = scalar_select %p30, %s31, %s32
      %p36 = pneg %p30
      %p37 = scmp.eq.s32.totalorder %s21, 1
      %p38 = por %p36, %p37
      %p39 = scmp.ne.s32.totalorder %s31, %s34
      %p40 = scmp.eq.s32.totalorder %s21, 0
      %p41 = por %p39, %p40
      %p42 = scmp.ne.s32.totalorder %s31, %s34
      %p43 = scmp.eq.s32.totalorder %s26, 1
      %p44 = por %p42, %p43
      %p45 = scmp.ne.s32.totalorder %s34, %s35
      %p46 = scmp.eq.s32.totalorder %s26, 0
      %p47 = por %p45, %p46
      %p48 = scmp.ne.s32.totalorder %s34, %s35
      %p49 = scmp.eq.s32.totalorder %s27, 1
      %p50 = por %p48, %p49
      %p52 = scmp.ne.s32.totalorder %s35, %s51
      %p53 = scmp.eq.s32.totalorder %s27, 0
      %p54 = por %p52, %p53
      %s56 = sadd.s32 %s55, 1
      %p59 = scmp.eq.s32.totalorder %s21, 1
      %p60 = scmp.ne.s32.totalorder %s55, %s57
      %p61 = scmp.eq.s32.totalorder %s21, 0
      %p62 = por %p60, %p61
      %p63 = scmp.ne.s32.totalorder %s55, %s57
      %p64 = scmp.eq.s32.totalorder %s26, 1
      %p65 = por %p63, %p64
      %p66 = scmp.ne.s32.totalorder %s57, %s58
      %p67 = scmp.eq.s32.totalorder %s26, 0
      %p68 = por %p66, %p67
      %p69 = scmp.ne.s32.totalorder %s57, %s58
      %p70 = scmp.eq.s32.totalorder %s27, 1
      %p71 = por %p69, %p70
      %p73 = scmp.ne.s32.totalorder %s58, %s72
      %p74 = scmp.eq.s32.totalorder %s27, 0
      %p75 = por %p73, %p74
      %s77 = sadd.s32 %s76, 1
      %p80 = scmp.eq.s32.totalorder %s21, 1
      %p81 = scmp.ne.s32.totalorder %s76, %s78
      %p82 = scmp.eq.s32.totalorder %s21, 0
      %p83 = por %p81, %p82
      %p84 = scmp.ne.s32.totalorder %s76, %s78
      %p85 = scmp.eq.s32.totalorder %s26, 1
      %p86 = por %p84, %p85
      %p87 = scmp.ne.s32.totalorder %s78, %s79
      %p88 = scmp.eq.s32.totalorder %s26, 0
      %p89 = por %p87, %p88
      %p90 = scmp.ne.s32.totalorder %s78, %s79
      %p91 = scmp.eq.s32.totalorder %s27, 1
      %p92 = por %p90, %p91
      %p94 = scmp.ne.s32.totalorder %s79, %s93
      %p95 = scmp.eq.s32.totalorder %s27, 0
      %p96 = por %p94, %p95
      %s98 = sadd.s32 %s97, 1
      %p101 = scmp.eq.s32.totalorder %s21, 1
      %p102 = scmp.ne.s32.totalorder %s97, %s99
      %p103 = scmp.eq.s32.totalorder %s21, 0
      %p104 = por %p102, %p103
      %p105 = scmp.ne.s32.totalorder %s97, %s99
      %p106 = scmp.eq.s32.totalorder %s26, 1
      %p107 = por %p105, %p106
      %p108 = scmp.ne.s32.totalorder %s99, %s100
      %p109 = scmp.eq.s32.totalorder %s26, 0
      %p110 = por %p108, %p109
      %p111 = scmp.ne.s32.totalorder %s99, %s100
      %p112 = scmp.eq.s32.totalorder %s27, 1
      %p113 = por %p111, %p112
      %p115 = scmp.ne.s32.totalorder %s100, %s114
      %p116 = scmp.eq.s32.totalorder %s27, 0
      %p117 = por %p115, %p116
      %s119 = sadd.s32 %s118, 1
      %p122 = scmp.eq.s32.totalorder %s21, 1
      %p123 = scmp.ne.s32.totalorder %s118, %s120
      %p124 = scmp.eq.s32.totalorder %s21, 0
      %p125 = por %p123, %p124
      %p126 = scmp.ne.s32.totalorder %s118, %s120
      %p127 = scmp.eq.s32.totalorder %s26, 1
      %p128 = por %p126, %p127
      %p129 = scmp.ne.s32.totalorder %s120, %s121
      %p130 = scmp.eq.s32.totalorder %s26, 0
      %p131 = por %p129, %p130
      %p132 = scmp.ne.s32.totalorder %s120, %s121
      %p133 = scmp.eq.s32.totalorder %s27, 1
      %p134 = por %p132, %p133
      %p136 = scmp.ne.s32.totalorder %s121, %s135
      %p137 = scmp.eq.s32.totalorder %s27, 0
      %p138 = por %p136, %p137
      %s140 = sadd.s32 %s139, 1
      %p143 = scmp.eq.s32.totalorder %s21, 1
      %p144 = scmp.ne.s32.totalorder %s139, %s141
      %p145 = scmp.eq.s32.totalorder %s21, 0
      %p146 = por %p144, %p145
      %p147 = scmp.ne.s32.totalorder %s139, %s141
      %p148 = scmp.eq.s32.totalorder %s26, 1
      %p149 = por %p147, %p148
      %p150 = scmp.ne.s32.totalorder %s141, %s142
      %p151 = scmp.eq.s32.totalorder %s26, 0
      %p152 = por %p150, %p151
      %p153 = scmp.ne.s32.totalorder %s141, %s142
      %p154 = scmp.eq.s32.totalorder %s27, 1
      %p155 = por %p153, %p154
      %p157 = scmp.ne.s32.totalorder %s142, %s156
      %p158 = scmp.eq.s32.totalorder %s27, 0
      %p159 = por %p157, %p158
      %s161 = sadd.s32 %s160, 1
      %p164 = scmp.eq.s32.totalorder %s21, 1
      %p165 = scmp.ne.s32.totalorder %s160, %s162
      %p166 = scmp.eq.s32.totalorder %s21, 0
      %p167 = por %p165, %p166
      %p168 = scmp.ne.s32.totalorder %s160, %s162
      %p169 = scmp.eq.s32.totalorder %s26, 1
      %p170 = por %p168, %p169
      %p171 = scmp.ne.s32.totalorder %s162, %s163
      %p172 = scmp.eq.s32.totalorder %s26, 0
      %p173 = por %p171, %p172
      %p174 = scmp.ne.s32.totalorder %s162, %s163
      %p175 = scmp.eq.s32.totalorder %s27, 1
      %p176 = por %p174, %p175
      %p178 = scmp.ne.s32.totalorder %s163, %s177
      %p179 = scmp.eq.s32.totalorder %s27, 0
      %p180 = por %p178, %p179
      %s181 = ssub.s32 %s21, %s28
      %p182 = scmp.eq.s32.totalorder %s181, 0
      %s184 = sadd.s32 %s183, 1
      %s185 = scalar_select %p182, %s183, %s184
      %p188 = pneg %p182
      %p189 = scmp.eq.s32.totalorder %s21, 1
      %p190 = por %p188, %p189
      %p191 = scmp.ne.s32.totalorder %s183, %s186
      %p192 = scmp.eq.s32.totalorder %s21, 0
      %p193 = por %p191, %p192
      %p194 = scmp.ne.s32.totalorder %s183, %s186
      %p195 = scmp.eq.s32.totalorder %s26, 1
      %p196 = por %p194, %p195
      %p197 = scmp.ne.s32.totalorder %s186, %s187
      %p198 = scmp.eq.s32.totalorder %s26, 0
      %p199 = por %p197, %p198
      %p200 = scmp.ne.s32.totalorder %s186, %s187
      %p201 = scmp.eq.s32.totalorder %s27, 1
      %p202 = por %p200, %p201
      %p204 = scmp.ne.s32.totalorder %s187, %s203
      %p205 = scmp.eq.s32.totalorder %s27, 0
      %p206 = por %p204, %p205
      %p207 = scmp.le.s32.totalorder 1, %s21
      %p208 = scmp.lt.s32.totalorder %s21, 3
      %p209 = pnand %p207, %p208
      %p210 = pneg %p209
      // Predicated region
      $region9: #{tpu_custom_call.1} parent=5 // pred_check
        _
      $region10: #{tpu_custom_call.1} parent=5 // pred_check_branch
        %212 = sbr.rel (%p209) target = $region12
      $region11: #{tpu_custom_call.1} parent=5 // pred_region
        %s213 = ssub.s32 %s21, 1
        // Predicated region
        $region13: #{tpu_custom_call.1} parent=11 // pred_check
          %p214 = pneg %p68
        $region14: #{tpu_custom_call.1} parent=11 // pred_check_branch
          %216 = sbr.rel (%p214) target = $region16
        $region15: #{tpu_custom_call.1} parent=11 // pred_region
          %218 = vsyncadd [#allocation6], 0
          %s219 = sshll.u32 %s1, 4
          %s220 = int_to_ptr.hbm [resolvable:$true] %s219
          %s221 = sshll.u32 [#allocation5], 4
          %s222 = int_to_ptr.vmem [resolvable:$true] %s221
          %227 = dma.hbm_to_vmem [thread:$0]  %s220, 1024, %s222, [#allocation6], 64, 64, 4
        $region16: #{tpu_custom_call.1} parent=11 // pred_fallthru
          _
        // Predicated region
        $region17: #{tpu_custom_call.1} parent=11 // pred_check
          %p228 = pneg %p89
        $region18: #{tpu_custom_call.1} parent=11 // pred_check_branch
          %230 = sbr.rel (%p228) target = $region20
        $region19: #{tpu_custom_call.1} parent=11 // pred_region
          _
        $region20: #{tpu_custom_call.1} parent=11 // pred_fallthru
          _
        // Predicated region
        $region21: #{tpu_custom_call.1} parent=11 // pred_check
          %p231 = pneg %p110
        $region22: #{tpu_custom_call.1} parent=11 // pred_check_branch
          %233 = sbr.rel (%p231) target = $region24
        $region23: #{tpu_custom_call.1} parent=11 // pred_region
          %235 = vsyncadd [#allocation6], 0
          %s236 = sshll.u32 %s3, 4
          %s237 = int_to_ptr.hbm [resolvable:$true] %s236
          %s238 = sshll.u32 [#allocation7], 4
          %s239 = int_to_ptr.vmem [resolvable:$true] %s238
          %244 = dma.hbm_to_vmem [thread:$0]  %s237, 1024, %s239, [#allocation6], 64, 64, 4
        $region24: #{tpu_custom_call.1} parent=11 // pred_fallthru
          _
        // Predicated region
        $region25: #{tpu_custom_call.1} parent=11 // pred_check
          %p245 = pneg %p131
        $region26: #{tpu_custom_call.1} parent=11 // pred_check_branch
          %247 = sbr.rel (%p245) target = $region28
        $region27: #{tpu_custom_call.1} parent=11 // pred_region
          _
        $region28: #{tpu_custom_call.1} parent=11 // pred_fallthru
          _
        // Predicated region
        $region29: #{tpu_custom_call.1} parent=11 // pred_check
          %p248 = pneg %p152
        $region30: #{tpu_custom_call.1} parent=11 // pred_check_branch
          %250 = sbr.rel (%p248) target = $region32
        $region31: #{tpu_custom_call.1} parent=11 // pred_region
          %252 = vsyncadd [#allocation9], 0
          %s253 = sshll.u32 %s5, 4
          %s254 = int_to_ptr.hbm [resolvable:$true] %s253
          %s255 = sshll.u32 [#allocation8], 4
          %s256 = int_to_ptr.vmem [resolvable:$true] %s255
          %261 = dma.hbm_to_vmem [thread:$0]  %s254, 1024, %s256, [#allocation9], 64, 64, 4
        $region32: #{tpu_custom_call.1} parent=11 // pred_fallthru
          _
        // Predicated region
        $region33: #{tpu_custom_call.1} parent=11 // pred_check
          %p262 = pneg %p173
        $region34: #{tpu_custom_call.1} parent=11 // pred_check_branch
          %264 = sbr.rel (%p262) target = $region36
        $region35: #{tpu_custom_call.1} parent=11 // pred_region
          _
        $region36: #{tpu_custom_call.1} parent=11 // pred_fallthru
          _
      $region12: #{tpu_custom_call.1} parent=5 // pred_fallthru
        _
      %p265 = scmp.lt.s32.totalorder %s21, 2
      // Predicated region
      $region37: #{tpu_custom_call.1} parent=5 // pred_check
        %p266 = pneg %p265
      $region38: #{tpu_custom_call.1} parent=5 // pred_check_branch
        %268 = sbr.rel (%p266) target = $region40
      $region39: #{tpu_custom_call.1} parent=5 // pred_region
        // Predicated region
        $region41: #{tpu_custom_call.1} parent=39 // pred_check
          %p269 = pneg %p41
        $region42: #{tpu_custom_call.1} parent=39 // pred_check_branch
          %271 = sbr.rel (%p269) target = $region44
        $region43: #{tpu_custom_call.1} parent=39 // pred_region
          %s272 = sand.u32 %s31, 1
          %s273 = scalar_lea.sflag [#allocation3], %s272
          %s274 = sand.u32 %s31, 1
          %s275 = smul.addr %s274, 4
          %s276 = scalar_lea.vmem [#allocation2], %s275
          %278 = vsyncadd %s273, 0
          %s279 = smul.addr %s21, 4
          %s280 = scalar_lea.hbm %s0, %s279
          %s282 = sshll.u32 %s280, 4
          %s283 = int_to_ptr.hbm [resolvable:$true] %s282
          %s284 = sshll.u32 %s276, 4
          %s285 = int_to_ptr.vmem [resolvable:$true] %s284
          %287 = dma.hbm_to_vmem [thread:$0]  %s283, 64, %s285, %s273
        $region44: #{tpu_custom_call.1} parent=39 // pred_fallthru
          _
      $region40: #{tpu_custom_call.1} parent=5 // pred_fallthru
        _
      %p288 = scmp.le.s32.totalorder 1, %s21
      %p289 = scmp.lt.s32.totalorder %s21, 3
      %p290 = pnand %p288, %p289
      %p291 = pneg %p290
      // Predicated region
      $region45: #{tpu_custom_call.1} parent=5 // pred_check
        _
      $region46: #{tpu_custom_call.1} parent=5 // pred_check_branch
        %293 = sbr.rel (%p290) target = $region48
      $region47: #{tpu_custom_call.1} parent=5 // pred_region
        %s294 = ssub.s32 %s21, 1
        %s295 = sand.u32 %s34, 1
        %s296 = scalar_lea.sflag [#allocation3], %s295
        %s297 = sand.u32 %s34, 1
        %s298 = smul.addr %s297, 4
        %s299 = scalar_lea.vmem [#allocation2], %s298
        // Predicated region
        $region49: #{tpu_custom_call.1} parent=47 // pred_check
          %p300 = pneg %p47
        $region50: #{tpu_custom_call.1} parent=47 // pred_check_branch
          %302 = sbr.rel (%p300) target = $region52
        $region51: #{tpu_custom_call.1} parent=47 // pred_region
          %304 = dma.done %s296, 64
        $region52: #{tpu_custom_call.1} parent=47 // pred_fallthru
          _
        // Predicated region
        $region53: #{tpu_custom_call.1} parent=47 // pred_check
          %p305 = pneg %p68
        $region54: #{tpu_custom_call.1} parent=47 // pred_check_branch
          %307 = sbr.rel (%p305) target = $region56
        $region55: #{tpu_custom_call.1} parent=47 // pred_region
          %309 = dma.done [#allocation6], 1024
        $region56: #{tpu_custom_call.1} parent=47 // pred_fallthru
          _
        // Predicated region
        $region57: #{tpu_custom_call.1} parent=47 // pred_check
          %p310 = pneg %p110
        $region58: #{tpu_custom_call.1} parent=47 // pred_check_branch
          %312 = sbr.rel (%p310) target = $region60
        $region59: #{tpu_custom_call.1} parent=47 // pred_region
          %314 = dma.done [#allocation6], 1024
        $region60: #{tpu_custom_call.1} parent=47 // pred_fallthru
          _
        // Predicated region
        $region61: #{tpu_custom_call.1} parent=47 // pred_check
          %p315 = pneg %p152
        $region62: #{tpu_custom_call.1} parent=47 // pred_check_branch
          %317 = sbr.rel (%p315) target = $region64
        $region63: #{tpu_custom_call.1} parent=47 // pred_region
          %319 = dma.done [#allocation9], 1024
        $region64: #{tpu_custom_call.1} parent=47 // pred_fallthru
          _
        %s320 = sand.u32 %s34, 1
        %s321 = scalar_lea.sflag [#allocation3], %s320
        %s322 = sand.u32 %s34, 1
        %s323 = smul.addr %s322, 4
        %s324 = scalar_lea.vmem [#allocation2], %s323
        %p325 = pneg %p47
        %p326 = pneg %p44
        %p327 = pneg %p68
        %p328 = pneg %p65
        %p329 = pneg %p89
        %p330 = pneg %p86
        %p331 = pneg %p110
        %p332 = pneg %p107
        %p333 = pneg %p131
        %p334 = pneg %p128
        %p335 = pneg %p152
        %p336 = pneg %p149
        %p337 = pneg %p173
        %p338 = pneg %p170
        %p339 = pneg %p199
        %p340 = pneg %p196
        %s341 = sand.u32 %s186, 1
        %s342 = scalar_lea.sflag [#allocation4], %s341
        %s343 = sand.u32 %s186, 1
        %s344 = smul.addr %s343, 8
        %s345 = scalar_lea.vmem [#allocation10], %s344
        %v346 = vld [vmem:[%s299] sm:$0xf]
        %v347 = vld [vmem:[#allocation5] sm:$0xf]
        %v348 = vld [vmem:[#allocation5 + $0x4] sm:$0xf]
        %v349 = vld [vmem:[#allocation5 + $0x8] sm:$0xf]
        %v350 = vld [vmem:[#allocation5 + $0xc] sm:$0xf]
        %v351 = vld [vmem:[#allocation5 + $0x10] sm:$0xf]
        %v352 = vld [vmem:[#allocation5 + $0x14] sm:$0xf]
        %v353 = vld [vmem:[#allocation5 + $0x18] sm:$0xf]
        %v354 = vld [vmem:[#allocation5 + $0x1c] sm:$0xf]
        %v355 = vld [vmem:[#allocation5 + $0x20] sm:$0xf]
        %v356 = vld [vmem:[#allocation5 + $0x24] sm:$0xf]
        %v357 = vld [vmem:[#allocation5 + $0x28] sm:$0xf]
        %v358 = vld [vmem:[#allocation5 + $0x2c] sm:$0xf]
        %v359 = vld [vmem:[#allocation5 + $0x30] sm:$0xf]
        %v360 = vld [vmem:[#allocation5 + $0x34] sm:$0xf]
        %v361 = vld [vmem:[#allocation5 + $0x38] sm:$0xf]
        %v362 = vld [vmem:[#allocation5 + $0x3c] sm:$0xf]
        %v363 = vld [vmem:[%s2] sm:$0x1]
        %v365 = vperm.slane %v363, 0
        %v383 = vunpack.c.l.b16 %v347
        %v384 = vunpack.c.l.b16 %v348
        %v385 = vunpack.c.l.b16 %v349
        %v386 = vunpack.c.l.b16 %v350
        %v387 = vunpack.c.l.b16 %v351
        %v388 = vunpack.c.l.b16 %v352
        %v389 = vunpack.c.l.b16 %v353
        %v390 = vunpack.c.l.b16 %v354
        %v391 = vunpack.c.l.b16 %v355
        %v392 = vunpack.c.l.b16 %v356
        %v393 = vunpack.c.l.b16 %v357
        %v394 = vunpack.c.l.b16 %v358
        %v395 = vunpack.c.l.b16 %v359
        %v396 = vunpack.c.l.b16 %v360
        %v397 = vunpack.c.l.b16 %v361
        %v398 = vunpack.c.l.b16 %v362
        %v399 = vpack.c.b16 %v384, %v383
        %v400 = vpack.c.b16 %v386, %v385
        %v401 = vpack.c.b16 %v388, %v387
        %v402 = vpack.c.b16 %v390, %v389
        %v403 = vpack.c.b16 %v392, %v391
        %v404 = vpack.c.b16 %v394, %v393
        %v405 = vpack.c.b16 %v396, %v395
        %v406 = vpack.c.b16 %v398, %v397
        %415 = vmatpush.bf16.msra.mxu0 %v406
        %416 = vmatpush.bf16.msra.mxu0 %v405
        %417 = vmatpush.bf16.msra.mxu0 %v404
        %418 = vmatpush.bf16.msra.mxu0 %v403
        %419 = vmatpush.bf16.msra.mxu0 %v402
        %420 = vmatpush.bf16.msra.mxu0 %v401
        %421 = vmatpush.bf16.msra.mxu0 %v400
        %422 = vmatpush.bf16.msra.mxu0 %v399
        %423 = vmatmul.bf16.gmra.mxu0 %v346
        %v424 = vpop.f32.mrf.mxu0
        %v425 = vadd.f32 %v365, %v424
        %v426 = vpop.f32.mrf.mxu0
        %427 = vdwg.mxu0
        %v428 = vmax.f32 %v425, 0.0
        %v429 = vld [vmem:[#allocation7] sm:$0xf]
        %v430 = vld [vmem:[#allocation7 + $0x4] sm:$0xf]
        %v431 = vld [vmem:[#allocation7 + $0x8] sm:$0xf]
        %v432 = vld [vmem:[#allocation7 + $0xc] sm:$0xf]
        %v433 = vld [vmem:[#allocation7 + $0x10] sm:$0xf]
        %v434 = vld [vmem:[#allocation7 + $0x14] sm:$0xf]
        %v435 = vld [vmem:[#allocation7 + $0x18] sm:$0xf]
        %v436 = vld [vmem:[#allocation7 + $0x1c] sm:$0xf]
        %v437 = vld [vmem:[#allocation7 + $0x20] sm:$0xf]
        %v438 = vld [vmem:[#allocation7 + $0x24] sm:$0xf]
        %v439 = vld [vmem:[#allocation7 + $0x28] sm:$0xf]
        %v440 = vld [vmem:[#allocation7 + $0x2c] sm:$0xf]
        %v441 = vld [vmem:[#allocation7 + $0x30] sm:$0xf]
        %v442 = vld [vmem:[#allocation7 + $0x34] sm:$0xf]
        %v443 = vld [vmem:[#allocation7 + $0x38] sm:$0xf]
        %v444 = vld [vmem:[#allocation7 + $0x3c] sm:$0xf]
        %v445 = vld [vmem:[%s4] sm:$0x1]
        %v446 = vpack.c.bf16 %v428, %v428
        %v448 = vperm.slane %v445, 0
        %v466 = vunpack.c.l.b16 %v429
        %v467 = vunpack.c.l.b16 %v430
        %v468 = vunpack.c.l.b16 %v431
        %v469 = vunpack.c.l.b16 %v432
        %v470 = vunpack.c.l.b16 %v433
        %v471 = vunpack.c.l.b16 %v434
        %v472 = vunpack.c.l.b16 %v435
        %v473 = vunpack.c.l.b16 %v436
        %v474 = vunpack.c.l.b16 %v437
        %v475 = vunpack.c.l.b16 %v438
        %v476 = vunpack.c.l.b16 %v439
        %v477 = vunpack.c.l.b16 %v440
        %v478 = vunpack.c.l.b16 %v441
        %v479 = vunpack.c.l.b16 %v442
        %v480 = vunpack.c.l.b16 %v443
        %v481 = vunpack.c.l.b16 %v444
        %v482 = vpack.c.b16 %v467, %v466
        %v483 = vpack.c.b16 %v469, %v468
        %v484 = vpack.c.b16 %v471, %v470
        %v485 = vpack.c.b16 %v473, %v472
        %v486 = vpack.c.b16 %v475, %v474
        %v487 = vpack.c.b16 %v477, %v476
        %v488 = vpack.c.b16 %v479, %v478
        %v489 = vpack.c.b16 %v481, %v480
        %498 = vmatpush.bf16.msra.mxu0 %v489
        %499 = vmatpush.bf16.msra.mxu0 %v488
        %500 = vmatpush.bf16.msra.mxu0 %v487
        %501 = vmatpush.bf16.msra.mxu0 %v486
        %502 = vmatpush.bf16.msra.mxu0 %v485
        %503 = vmatpush.bf16.msra.mxu0 %v484
        %504 = vmatpush.bf16.msra.mxu0 %v483
        %505 = vmatpush.bf16.msra.mxu0 %v482
        %506 = vmatmul.bf16.gmra.mxu0 %v446
        %v507 = vpop.f32.mrf.mxu0
        %v508 = vadd.f32 %v448, %v507
        %v509 = vpop.f32.mrf.mxu0
        %510 = vdwg.mxu0
        %v511 = vmax.f32 %v508, 0.0
        %v512 = vld [vmem:[#allocation8] sm:$0xf]
        %v513 = vld [vmem:[#allocation8 + $0x4] sm:$0xf]
        %v514 = vld [vmem:[#allocation8 + $0x8] sm:$0xf]
        %v515 = vld [vmem:[#allocation8 + $0xc] sm:$0xf]
        %v516 = vld [vmem:[#allocation8 + $0x10] sm:$0xf]
        %v517 = vld [vmem:[#allocation8 + $0x14] sm:$0xf]
        %v518 = vld [vmem:[#allocation8 + $0x18] sm:$0xf]
        %v519 = vld [vmem:[#allocation8 + $0x1c] sm:$0xf]
        %v520 = vld [vmem:[#allocation8 + $0x20] sm:$0xf]
        %v521 = vld [vmem:[#allocation8 + $0x24] sm:$0xf]
        %v522 = vld [vmem:[#allocation8 + $0x28] sm:$0xf]
        %v523 = vld [vmem:[#allocation8 + $0x2c] sm:$0xf]
        %v524 = vld [vmem:[#allocation8 + $0x30] sm:$0xf]
        %v525 = vld [vmem:[#allocation8 + $0x34] sm:$0xf]
        %v526 = vld [vmem:[#allocation8 + $0x38] sm:$0xf]
        %v527 = vld [vmem:[#allocation8 + $0x3c] sm:$0xf]
        %v528 = vld [vmem:[%s6] sm:$0x1]
        %v529 = vpack.c.bf16 %v511, %v511
        %v531 = vperm.slane %v528, 0
        %v549 = vunpack.c.l.b16 %v512
        %v550 = vunpack.c.l.b16 %v513
        %v551 = vunpack.c.l.b16 %v514
        %v552 = vunpack.c.l.b16 %v515
        %v553 = vunpack.c.l.b16 %v516
        %v554 = vunpack.c.l.b16 %v517
        %v555 = vunpack.c.l.b16 %v518
        %v556 = vunpack.c.l.b16 %v519
        %v557 = vunpack.c.l.b16 %v520
        %v558 = vunpack.c.l.b16 %v521
        %v559 = vunpack.c.l.b16 %v522
        %v560 = vunpack.c.l.b16 %v523
        %v561 = vunpack.c.l.b16 %v524
        %v562 = vunpack.c.l.b16 %v525
        %v563 = vunpack.c.l.b16 %v526
        %v564 = vunpack.c.l.b16 %v527
        %v565 = vpack.c.b16 %v550, %v549
        %v566 = vpack.c.b16 %v552, %v551
        %v567 = vpack.c.b16 %v554, %v553
        %v568 = vpack.c.b16 %v556, %v555
        %v569 = vpack.c.b16 %v558, %v557
        %v570 = vpack.c.b16 %v560, %v559
        %v571 = vpack.c.b16 %v562, %v561
        %v572 = vpack.c.b16 %v564, %v563
        %581 = vmatpush.bf16.msra.mxu0 %v572
        %582 = vmatpush.bf16.msra.mxu0 %v571
        %583 = vmatpush.bf16.msra.mxu0 %v570
        %584 = vmatpush.bf16.msra.mxu0 %v569
        %585 = vmatpush.bf16.msra.mxu0 %v568
        %586 = vmatpush.bf16.msra.mxu0 %v567
        %587 = vmatpush.bf16.msra.mxu0 %v566
        %588 = vmatpush.bf16.msra.mxu0 %v565
        %589 = vmatmul.bf16.gmra.mxu0 %v529
        %v590 = vpop.f32.mrf.mxu0
        %v591 = vadd.f32 %v531, %v590
        %v592 = vpop.f32.mrf.mxu0
        %593 = vdwg.mxu0
        %594 = vst [vmem:[%s345] sm:$0xff] %v591
        %s595 = sand.u32 %s186, 1
        %s596 = scalar_lea.sflag [#allocation4], %s595
        %s597 = sand.u32 %s186, 1
        %s598 = smul.addr %s597, 8
        %s599 = scalar_lea.vmem [#allocation10], %s598
        // Predicated region
        $region65: #{tpu_custom_call.1} parent=47 // pred_check
          %p600 = pneg %p196
        $region66: #{tpu_custom_call.1} parent=47 // pred_check_branch
          %602 = sbr.rel (%p600) target = $region68
        $region67: #{tpu_custom_call.1} parent=47 // pred_region
          %604 = vsyncadd %s596, 0
          %s605 = smul.addr %s26, 8
          %s606 = scalar_lea.hbm %s7, %s605
          %s608 = sshll.u32 %s599, 4
          %s609 = int_to_ptr.vmem [resolvable:$true] %s608
          %s610 = sshll.u32 %s606, 4
          %s611 = int_to_ptr.hbm [resolvable:$true] %s610
          %613 = dma.vmem_to_hbm [thread:$0]  %s609, 128, %s611, %s596
        $region68: #{tpu_custom_call.1} parent=47 // pred_fallthru
          _
      $region48: #{tpu_custom_call.1} parent=5 // pred_fallthru
        _
      %p614 = scmp.le.s32.totalorder 2, %s21
      // Predicated region
      $region69: #{tpu_custom_call.1} parent=5 // pred_check
        %p615 = pneg %p614
      $region70: #{tpu_custom_call.1} parent=5 // pred_check_branch
        %617 = sbr.rel (%p615) target = $region72
      $region71: #{tpu_custom_call.1} parent=5 // pred_region
        %s618 = ssub.s32 %s21, 2
        // Predicated region
        $region73: #{tpu_custom_call.1} parent=71 // pred_check
          %p619 = pneg %p202
        $region74: #{tpu_custom_call.1} parent=71 // pred_check_branch
          %621 = sbr.rel (%p619) target = $region76
        $region75: #{tpu_custom_call.1} parent=71 // pred_region
          %s622 = sand.u32 %s187, 1
          %s623 = scalar_lea.sflag [#allocation4], %s622
          %s624 = sand.u32 %s187, 1
          %s625 = smul.addr %s624, 8
          %s626 = scalar_lea.vmem [#allocation10], %s625
          %628 = dma.done %s623, 128
        $region76: #{tpu_custom_call.1} parent=71 // pred_fallthru
          _
      $region72: #{tpu_custom_call.1} parent=5 // pred_fallthru
        _
    $region6: #{tpu_custom_call.1} parent=1 // loop_footer
      %s25 = sadd.s32 1, %s21
    $region7: #{tpu_custom_call.1} parent=1 // loop_footer_branch
      %20 = sbr.rel target = $region3
    $region8: #{tpu_custom_call.1} parent=1 // loop_exit
      _
    %629 = vsyncpa [#allocation3], 1
    %s630 = scalar_lea.sflag [#allocation3], 1
    %631 = vsyncpa %s630, 1
    %632 = vsyncpa [#allocation6], 1
    %633 = vsyncpa [#allocation9], 1
    %634 = vsyncpa [#allocation4], 1
    %s635 = scalar_lea.sflag [#allocation4], 1
    %636 = vsyncpa %s635, 1

</llo_original>
